<compile_context>
chip_gen: v5e
topology: v5e:2x2
jax: 0.10.0
libtpu: 0.0.40
codegen_flags: <defaults>
</compile_context>

<pallas_src>
import jax
import jax.numpy as jnp
from jax import lax
from jax.experimental import pallas as pl
from jax.experimental.pallas import tpu as pltpu


def _round_up(x, m):
    return ((x + m - 1) // m) * m


def _conve_score_kernel(hr_ref, tail_ref, wconv_ref, bconv_ref, wfc_ref, bfc_ref,
                        score_ref):
    """Scores one batch tile: rowsum((relu(hr@Wconv+bc) @ WfcT + bf) * tail)."""
    # conv-as-matmul (MXU, f32 accumulation) + bias + ReLU  -> (TB, F) f32
    feat = jnp.dot(hr_ref[...], wconv_ref[...], preferred_element_type=jnp.float32)
    feat = jnp.maximum(feat + bconv_ref[...], 0.0)
    # fully-connected layer (MXU)  -> (TB, Dp) f32
    x = jnp.dot(feat.astype(wfc_ref.dtype), wfc_ref[...],
                preferred_element_type=jnp.float32)
    x = x + bfc_ref[...]
    # readout against the tail embedding: per-row reduction (f32, v5e-safe).
    score_ref[...] = jnp.sum(x * tail_ref[...].astype(jnp.float32), axis=1,
                             keepdims=True)


def conve_scores(hr, tail, w_conv, b_conv, w_fc_t, b_fc, *, block_b=128,
                 operand_dtype=jnp.bfloat16):
    """hr: (N, Kp) f32, tail: (N, Dp) f32  ->  (N,) f32 ConvE scores."""
    n, k = hr.shape
    d = tail.shape[1]
    f = w_conv.shape[1]

    tb = min(block_b, _round_up(n, 8))
    n_pad = _round_up(n, tb)
    if n_pad != n:
        hr = jnp.pad(hr, ((0, n_pad - n), (0, 0)))
        tail = jnp.pad(tail, ((0, n_pad - n), (0, 0)))

    # bf16 transport / MXU operands, f32 biases + accumulation.
    hr = hr.astype(operand_dtype)
    tail = tail.astype(operand_dtype)
    w_conv = w_conv.astype(operand_dtype)
    w_fc_t = w_fc_t.astype(operand_dtype)
    b_conv = b_conv.astype(jnp.float32)
    b_fc = b_fc.astype(jnp.float32)

    op_bytes = jnp.dtype(operand_dtype).itemsize
    cost = pl.CostEstimate(
        flops=2 * n_pad * f * (k + d) + 3 * n_pad * (f + d),
        transcendentals=0,
        bytes_accessed=(n_pad * (k + d) * op_bytes
                        + (k * f + f * d) * op_bytes
                        + (f + d) * 4 + n_pad * 4),
    )

    scores = pl.pallas_call(
        _conve_score_kernel,
        out_shape=jax.ShapeDtypeStruct((n_pad, 1), jnp.float32),
        grid_spec=pltpu.PrefetchScalarGridSpec(
            num_scalar_prefetch=0,
            grid=(n_pad // tb,),
            in_specs=[
                pl.BlockSpec((tb, k), lambda i: (i, 0)),   # hr (batch-tiled)
                pl.BlockSpec((tb, d), lambda i: (i, 0)),   # tail (batch-tiled)
                pl.BlockSpec((k, f), lambda i: (0, 0)),    # folded conv weights
                pl.BlockSpec((1, f), lambda i: (0, 0)),    # conv bias (flattened)
                pl.BlockSpec((f, d), lambda i: (0, 0)),    # fc weight^T
                pl.BlockSpec((1, d), lambda i: (0, 0)),    # fc bias
            ],
            out_specs=pl.BlockSpec((tb, 1), lambda i: (i, 0)),
        ),
        compiler_params=pltpu.CompilerParams(dimension_semantics=("parallel",)),
        cost_estimate=cost,
    )(hr, tail, w_conv, b_conv, w_fc_t, b_fc)
    return scores[:n, 0]


class ConvEPallas:
    NUM_FILTERS = 32

    def __init__(self, num_entities, num_relations, embedding_dim, key):
        assert embedding_dim % 4 == 0, "embedding_dim must be divisible by 4"
        self.num_entities = num_entities
        self.num_relations = num_relations
        self.embedding_dim = embedding_dim
        d = embedding_dim
        h_img, w_img = d // 4, 8
        conv_out_size = self.NUM_FILTERS * h_img * w_img   # == 64 * d

        k_ent, k_rel, k_cw, k_cb, k_fw, k_fb = jax.random.split(key, 6)
        bound = 6.0 / d ** 0.5
        self.entity_embeddings = jax.random.uniform(
            k_ent, (num_entities, d), jnp.float32, -bound, bound)
        self.relation_embeddings = jax.random.uniform(
            k_rel, (num_relations, d), jnp.float32, -bound, bound)
        # Conv2d(1, 32, 3x3, pad=1) and Linear(conv_out_size, D) params
        # (PyTorch-default kaiming-uniform style bounds).
        cb = 1.0 / 3.0
        self.conv_w = jax.random.uniform(
            k_cw, (self.NUM_FILTERS, 1, 3, 3), jnp.float32, -cb, cb)
        self.conv_b = jax.random.uniform(
            k_cb, (self.NUM_FILTERS,), jnp.float32, -cb, cb)
        fb = 1.0 / conv_out_size ** 0.5
        self.fc_w = jax.random.uniform(
            k_fw, (d, conv_out_size), jnp.float32, -fb, fb)
        self.fc_b = jax.random.uniform(k_fb, (d,), jnp.float32, -fb, fb)

        # ---- Weight-space precompute: fold conv(+flatten) into one matrix by
        #      probing the (linear) conv with identity basis vectors of hr. ----
        basis = jnp.eye(2 * d, dtype=jnp.float32)              # row j = e_j
        head_b = basis[:, :d].reshape(2 * d, 1, h_img, 4)
        rel_b = basis[:, d:].reshape(2 * d, 1, h_img, 4)
        img_b = jnp.concatenate([head_b, rel_b], axis=3)        # (2D, 1, H, 8)
        conv_cols = lax.conv_general_dilated(
            img_b, self.conv_w, window_strides=(1, 1), padding=((1, 1), (1, 1)),
            dimension_numbers=("NCHW", "OIHW", "NCHW"))         # (2D, 32, H, 8)
        w_conv = conv_cols.reshape(2 * d, conv_out_size)        # (2D, F)
        b_conv = jnp.broadcast_to(
            self.conv_b[:, None], (self.NUM_FILTERS, h_img * w_img)).reshape(1, -1)

        # ---- Lane-dense padding: round small dims to multiples of 128. ----
        self._k_pad = _round_up(2 * d, 128)
        self._d_pad = _round_up(d, 128)
        self.w_conv = jnp.pad(w_conv, ((0, self._k_pad - 2 * d), (0, 0)))
        self.b_conv = b_conv                                    # F already %128==0
        self.w_fc_t = jnp.pad(self.fc_w.T, ((0, 0), (0, self._d_pad - d)))
        self.b_fc = jnp.pad(self.fc_b[None, :], ((0, 0), (0, self._d_pad - d)))

    def _gather(self, triplets):
        # nn.Embedding lookup done as glue in plain JAX (tiny tables here).
        h = jnp.take(self.entity_embeddings, triplets[:, 0], axis=0)
        r = jnp.take(self.relation_embeddings, triplets[:, 1], axis=0)
        t = jnp.take(self.entity_embeddings, triplets[:, 2], axis=0)
        return h, r, t

    def forward(self, pos_triplets, neg_triplets):
        num_pos = pos_triplets.shape[0]
        d = self.embedding_dim
        all_t = jnp.concatenate([pos_triplets, neg_triplets], axis=0)
        h, r, t = self._gather(all_t)
        hr = jnp.concatenate([h, r], axis=1)                    # (2B, 2D)
        hr = jnp.pad(hr, ((0, 0), (0, self._k_pad - 2 * d)))
        tail = jnp.pad(t, ((0, 0), (0, self._d_pad - d)))
        scores = conve_scores(hr, tail, self.w_conv, self.b_conv,
                              self.w_fc_t, self.b_fc)
        pos_s, neg_s = scores[:num_pos], scores[num_pos:]
        # MarginRankingLoss(margin=1.0) with target = +1, mean reduction.
        return jnp.mean(jnp.maximum(neg_s - pos_s + 1.0, 0.0))


if __name__ == "__main__":
    num_entities = 20
    num_relations = 5
    embedding_dim = 32     # image is (8, 8); conv features = 64 * 32 = 2048
    batch = 8

    key = jax.random.PRNGKey(0)
    k_model, k_pos, k_neg = jax.random.split(key, 3)

    model = ConvEPallas(num_entities, num_relations, embedding_dim, k_model)

    def rand_triplets(k, n):
        kh, kr, kt = jax.random.split(k, 3)
        return jnp.stack([
            jax.random.randint(kh, (n,), 0, num_entities, jnp.int32),
            jax.random.randint(kr, (n,), 0, num_relations, jnp.int32),
            jax.random.randint(kt, (n,), 0, num_entities, jnp.int32),
        ], axis=1)

    pos_triplets = rand_triplets(k_pos, batch)
    neg_triplets = rand_triplets(k_neg, batch)

    loss = model.forward(pos_triplets, neg_triplets)
    jax.block_until_ready(loss)

    # ---- Pure-JAX f32 reference of the original ConvE forward (eval mode). ----
    def ref_loss(pos_t, neg_t):
        allt = jnp.concatenate([pos_t, neg_t], axis=0)
        h = model.entity_embeddings[allt[:, 0]]
        r = model.relation_embeddings[allt[:, 1]]
        t = model.entity_embeddings[allt[:, 2]]
        n = allt.shape[0]
        img = jnp.concatenate(
            [h.reshape(n, 1, embedding_dim // 4, 4),
             r.reshape(n, 1, embedding_dim // 4, 4)], axis=3)
        c = lax.conv_general_dilated(
            img, model.conv_w, (1, 1), ((1, 1), (1, 1)),
            dimension_numbers=("NCHW", "OIHW", "NCHW"))
        c = jnp.maximum(c + model.conv_b[None, :, None, None], 0.0)
        x = c.reshape(n, -1) @ model.fc_w.T + model.fc_b
        scores = jnp.sum(x * t, axis=1)
        p, q = scores[:batch], scores[batch:]
        return jnp.mean(jnp.maximum(q - p + 1.0, 0.0))

    ref = ref_loss(pos_triplets, neg_triplets)

    # (a) Validate the conv->matmul weight folding itself in pure f32 JAX.
    allt = jnp.concatenate([pos_triplets, neg_triplets], axis=0)
    h32, r32, t32 = model._gather(allt)
    hr32 = jnp.concatenate([h32, r32], axis=1)
    feat32 = jnp.maximum(hr32 @ model.w_conv[:2 * embedding_dim] + model.b_conv, 0.0)
    x32 = feat32 @ model.fc_w.T + model.fc_b
    s32 = jnp.sum(x32 * t32, axis=1)
    loss32 = jnp.mean(jnp.maximum(s32[batch:] - s32[:batch] + 1.0, 0.0))
    assert jnp.allclose(loss32, ref, atol=2e-3, rtol=2e-3), (loss32, ref)

    # (b) Kernel (bf16 MXU operands, f32 accumulation) vs f32 reference.
    assert jnp.isfinite(loss), loss
    assert jnp.allclose(loss, ref, atol=5e-2, rtol=5e-2), (loss, ref)

    print("KERNEL_OK")
</pallas_src>

<mosaic_0001>
module attributes {stable_mosaic.version = 11 : i64} {
  func.func @_conve_score_kernel(%arg0: i32, %arg1: memref<16x128xbf16, #tpu.memory_space<vmem>>, %arg2: memref<16x128xbf16, #tpu.memory_space<vmem>>, %arg3: memref<128x2048xbf16, #tpu.memory_space<vmem>>, %arg4: memref<1x2048xf32, #tpu.memory_space<vmem>>, %arg5: memref<2048x128xbf16, #tpu.memory_space<vmem>>, %arg6: memref<1x128xf32, #tpu.memory_space<vmem>>, %arg7: memref<16x1xf32, #tpu.memory_space<vmem>>) attributes {dimension_semantics = [#tpu.dimension_semantics<parallel>], iteration_bounds = array<i64: 1>, scalar_prefetch = 0 : i64, scratch_operands = 0 : i64, tpu.core_type = #tpu.core_type<tc>, window_params = [{transform_indices = @transform_0, window_bounds = array<i64: 16, 128>}, {transform_indices = @transform_1, window_bounds = array<i64: 16, 128>}, {pipeline_mode = #tpu.pipeline_mode<synchronous>, transform_indices = @transform_2, window_bounds = array<i64: 128, 2048>}, {pipeline_mode = #tpu.pipeline_mode<synchronous>, transform_indices = @transform_3, window_bounds = array<i64: 1, 2048>}, {pipeline_mode = #tpu.pipeline_mode<synchronous>, transform_indices = @transform_4, window_bounds = array<i64: 2048, 128>}, {pipeline_mode = #tpu.pipeline_mode<synchronous>, transform_indices = @transform_5, window_bounds = array<i64: 1, 128>}, {transform_indices = @transform_6, window_bounds = array<i64: 16, 1>}]} {
    %c0 = arith.constant 0 : index
    %c0_0 = arith.constant 0 : index
    %0 = vector.load %arg1[%c0, %c0_0] : memref<16x128xbf16, #tpu.memory_space<vmem>>, vector<16x128xbf16>
    %c0_1 = arith.constant 0 : index
    %c0_2 = arith.constant 0 : index
    %1 = vector.load %arg3[%c0_1, %c0_2] : memref<128x2048xbf16, #tpu.memory_space<vmem>>, vector<128x2048xbf16>
    %cst = arith.constant dense<0.000000e+00> : vector<16x2048xf32>
    %2 = tpu.matmul %0, %1, %cst {dimension_numbers = #tpu.dot_dimension_numbers<[1], [0], [0], [1], [0, 0, 1, 1], [], []>} : vector<16x128xbf16>, vector<128x2048xbf16>, vector<16x2048xf32> -> vector<16x2048xf32>
    %c0_3 = arith.constant 0 : index
    %c0_4 = arith.constant 0 : index
    %3 = vector.load %arg4[%c0_3, %c0_4] : memref<1x2048xf32, #tpu.memory_space<vmem>>, vector<1x2048xf32>
    %4 = vector.broadcast %3 : vector<1x2048xf32> to vector<16x2048xf32>
    %5 = arith.addf %2, %4 : vector<16x2048xf32>
    %cst_5 = arith.constant 0.000000e+00 : f32
    %6 = vector.broadcast %cst_5 : f32 to vector<16x2048xf32>
    %7 = arith.maximumf %5, %6 : vector<16x2048xf32>
    %8 = arith.truncf %7 : vector<16x2048xf32> to vector<16x2048xbf16>
    %c0_6 = arith.constant 0 : index
    %c0_7 = arith.constant 0 : index
    %9 = vector.load %arg5[%c0_6, %c0_7] : memref<2048x128xbf16, #tpu.memory_space<vmem>>, vector<2048x128xbf16>
    %cst_8 = arith.constant dense<0.000000e+00> : vector<16x128xf32>
    %10 = tpu.matmul %8, %9, %cst_8 {dimension_numbers = #tpu.dot_dimension_numbers<[1], [0], [0], [1], [0, 0, 1, 1], [], []>} : vector<16x2048xbf16>, vector<2048x128xbf16>, vector<16x128xf32> -> vector<16x128xf32>
    %c0_9 = arith.constant 0 : index
    %c0_10 = arith.constant 0 : index
    %11 = vector.load %arg6[%c0_9, %c0_10] : memref<1x128xf32, #tpu.memory_space<vmem>>, vector<1x128xf32>
    %12 = vector.broadcast %11 : vector<1x128xf32> to vector<16x128xf32>
    %13 = arith.addf %10, %12 : vector<16x128xf32>
    %c0_11 = arith.constant 0 : index
    %c0_12 = arith.constant 0 : index
    %14 = vector.load %arg2[%c0_11, %c0_12] : memref<16x128xbf16, #tpu.memory_space<vmem>>, vector<16x128xbf16>
    %15 = arith.extf %14 : vector<16x128xbf16> to vector<16x128xf32>
    %16 = arith.mulf %13, %15 : vector<16x128xf32>
    %cst_13 = arith.constant dense<0.000000e+00> : vector<16xf32>
    %17 = vector.multi_reduction <add>, %16, %cst_13 [1] : vector<16x128xf32> to vector<16xf32>
    %18 = vector.shape_cast %17 : vector<16xf32> to vector<16x1xf32>
    %c0_14 = arith.constant 0 : index
    %c0_15 = arith.constant 0 : index
    %19 = vector.load %arg7[%c0_14, %c0_15] : memref<16x1xf32, #tpu.memory_space<vmem>>, vector<16x1xf32>
    tpu.vector_store %arg7[%c0_14, %c0_15], %18 {strides = array<i32>} : memref<16x1xf32, #tpu.memory_space<vmem>>, vector<16x1xf32>,
    return
  }
  func.func @transform_0(%arg0: i32) -> (i32, i32) {
    %c0_i32 = arith.constant 0 : i32
    %c0_i32_0 = arith.constant 0 : i32
    return %arg0, %c0_i32 : i32, i32
  }
  func.func @transform_1(%arg0: i32) -> (i32, i32) {
    %c0_i32 = arith.constant 0 : i32
    %c0_i32_0 = arith.constant 0 : i32
    return %arg0, %c0_i32 : i32, i32
  }
  func.func @transform_2(%arg0: i32) -> (i32, i32) {
    %c0_i32 = arith.constant 0 : i32
    %c0_i32_0 = arith.constant 0 : i32
    %c0_i32_1 = arith.constant 0 : i32
    return %c0_i32, %c0_i32_0 : i32, i32
  }
  func.func @transform_3(%arg0: i32) -> (i32, i32) {
    %c0_i32 = arith.constant 0 : i32
    %c0_i32_0 = arith.constant 0 : i32
    %c0_i32_1 = arith.constant 0 : i32
    return %c0_i32, %c0_i32_0 : i32, i32
  }
  func.func @transform_4(%arg0: i32) -> (i32, i32) {
    %c0_i32 = arith.constant 0 : i32
    %c0_i32_0 = arith.constant 0 : i32
    %c0_i32_1 = arith.constant 0 : i32
    return %c0_i32, %c0_i32_0 : i32, i32
  }
  func.func @transform_5(%arg0: i32) -> (i32, i32) {
    %c0_i32 = arith.constant 0 : i32
    %c0_i32_0 = arith.constant 0 : i32
    %c0_i32_1 = arith.constant 0 : i32
    return %c0_i32, %c0_i32_0 : i32, i32
  }
  func.func @transform_6(%arg0: i32) -> (i32, i32) {
    %c0_i32 = arith.constant 0 : i32
    %c0_i32_0 = arith.constant 0 : i32
    return %arg0, %c0_i32 : i32, i32
  }
}

</mosaic_0001>

<llo_original>
// kernel: tpu_custom_call.1
$region0: #{tpu_custom_call.1}
  #allocation0 [shape = 'u32[]', space=smem, size = 0x4, offset = 0x4, fixed_abs, tag = 'smem constant byte address 0x4 - core index']
  #allocation1 [shape = 'u32[72,128]{1,0:T(1,128)}', space=vmem, size = 0x9000, scoped, tag = 'internal scratch']
  %s0 = inlined_call_operand.hbm [shape: bf16[16,128], index: 0, kind: input, shape index: {}]
  %s1 = inlined_call_operand.hbm [shape: bf16[16,128], index: 1, kind: input, shape index: {}]
  %s2 = inlined_call_operand.hbm [shape: bf16[128,2048], index: 2, kind: input, shape index: {}]
  %s3 = inlined_call_operand.hbm [shape: f32[1,2048], index: 3, kind: input, shape index: {}]
  %s4 = inlined_call_operand.hbm [shape: bf16[2048,128], index: 4, kind: input, shape index: {}]
  %s5 = inlined_call_operand.vmem [shape: f32[1,128], index: 5, kind: input, shape index: {}]
  %s6 = inlined_call_operand.vmem [shape: f32[16,1], index: 6, kind: output, shape index: {}]
  %s7 = sld [smem:[#allocation0]]
  $region54: #{tpu_custom_call.1} parent=0
    _
  %s9 = ssub.s32 1, %s7
  %s10 = scalar_select 0, %s9, %s7
  $region1: #{tpu_custom_call.1} parent=0
    #allocation2 [shape = 'u8[4096]{0}', space=vmem, size = 0x1000, scoped, tag = 'input window, operand 0, single buffered']
    #allocation3 [shape = 's32[1]{0}', space=sflag, size = 0x4, scoped, tag = 'scoped memory for tpu_custom_call.1']
    #allocation4 [shape = 'u8[4096]{0}', space=vmem, size = 0x1000, scoped, tag = 'input window, operand 1, single buffered']
    #allocation5 [shape = 's32[1]{0}', space=sflag, size = 0x4, scoped, tag = 'scoped memory for tpu_custom_call.1']
    #allocation6 [shape = 'u8[524288]{0}', space=vmem, size = 0x80000, scoped, tag = 'input window, operand 2, single buffered']
    #allocation7 [shape = 'u8[8192]{0}', space=vmem, size = 0x2000, scoped, tag = 'input window, operand 3, single buffered']
    #allocation8 [shape = 's32[1]{0}', space=sflag, size = 0x4, scoped, tag = 'scoped memory for tpu_custom_call.1']
    #allocation9 [shape = 'u8[524288]{0}', space=vmem, size = 0x80000, scoped, tag = 'input window, operand 4, single buffered']
    %11 = vsyncpa [#allocation3], 0
    %12 = vsyncpa [#allocation5], 0
    %13 = vsyncpa [#allocation8], 0
    // Predicated region
    $region2: #{tpu_custom_call.1} parent=1 // pred_check
      _
    $region3: #{tpu_custom_call.1} parent=1 // pred_check_branch
      %15 = sbr.rel (0) target = $region5
    $region4: #{tpu_custom_call.1} parent=1 // pred_region
      %17 = vsyncadd [#allocation3], 0
      %s18 = sshll.u32 %s0, 4
      %s19 = int_to_ptr.hbm [resolvable:$true] %s18
      %s20 = sshll.u32 [#allocation2], 4
      %s21 = int_to_ptr.vmem [resolvable:$true] %s20
      %26 = dma.hbm_to_vmem [thread:$0]  %s19, 128, %s21, [#allocation3], 64, 64, 4
    $region5: #{tpu_custom_call.1} parent=1 // pred_fallthru
      _
    // Predicated region
    $region6: #{tpu_custom_call.1} parent=1 // pred_check
      _
    $region7: #{tpu_custom_call.1} parent=1 // pred_check_branch
      %28 = sbr.rel (0) target = $region9
    $region8: #{tpu_custom_call.1} parent=1 // pred_region
      %30 = vsyncadd [#allocation5], 0
      %s31 = sshll.u32 %s1, 4
      %s32 = int_to_ptr.hbm [resolvable:$true] %s31
      %s33 = sshll.u32 [#allocation4], 4
      %s34 = int_to_ptr.vmem [resolvable:$true] %s33
      %39 = dma.hbm_to_vmem [thread:$0]  %s32, 128, %s34, [#allocation5], 64, 64, 4
    $region9: #{tpu_custom_call.1} parent=1 // pred_fallthru
      _
    // Predicated region
    $region10: #{tpu_custom_call.1} parent=1 // pred_check
      _
    $region11: #{tpu_custom_call.1} parent=1 // pred_check_branch
      %41 = sbr.rel (0) target = $region13
    $region12: #{tpu_custom_call.1} parent=1 // pred_region
      %43 = vsyncadd [#allocation5], 0
      %s44 = sshll.u32 %s2, 4
      %s45 = int_to_ptr.hbm [resolvable:$true] %s44
      %s46 = sshll.u32 [#allocation6], 4
      %s47 = int_to_ptr.vmem [resolvable:$true] %s46
      %52 = dma.hbm_to_vmem [thread:$0]  %s45, 16384, %s47, [#allocation5], 1024, 1024, 64
    $region13: #{tpu_custom_call.1} parent=1 // pred_fallthru
      _
    // Predicated region
    $region14: #{tpu_custom_call.1} parent=1 // pred_check
      _
    $region15: #{tpu_custom_call.1} parent=1 // pred_check_branch
      %54 = sbr.rel (0) target = $region17
    $region16: #{tpu_custom_call.1} parent=1 // pred_region
      %56 = vsyncadd [#allocation8], 0
      %s58 = sshll.u32 %s3, 4
      %s59 = int_to_ptr.hbm [resolvable:$true] %s58
      %s60 = sshll.u32 [#allocation7], 4
      %s61 = int_to_ptr.vmem [resolvable:$true] %s60
      %63 = dma.hbm_to_vmem [thread:$0]  %s59, 256, %s61, [#allocation8]
    $region17: #{tpu_custom_call.1} parent=1 // pred_fallthru
      _
    // Predicated region
    $region18: #{tpu_custom_call.1} parent=1 // pred_check
      _
    $region19: #{tpu_custom_call.1} parent=1 // pred_check_branch
      %65 = sbr.rel (0) target = $region21
    $region20: #{tpu_custom_call.1} parent=1 // pred_region
      %67 = vsyncadd [#allocation8], 0
      %s68 = sshll.u32 %s4, 4
      %s69 = int_to_ptr.hbm [resolvable:$true] %s68
      %s70 = sshll.u32 [#allocation9], 4
      %s71 = int_to_ptr.vmem [resolvable:$true] %s70
      %76 = dma.hbm_to_vmem [thread:$0]  %s69, 16384, %s71, [#allocation8], 64, 64, 4
    $region21: #{tpu_custom_call.1} parent=1 // pred_fallthru
      _
    // Predicated region
    $region22: #{tpu_custom_call.1} parent=1 // pred_check
      _
    $region23: #{tpu_custom_call.1} parent=1 // pred_check_branch
      %78 = sbr.rel (0) target = $region25
    $region24: #{tpu_custom_call.1} parent=1 // pred_region
      _
    $region25: #{tpu_custom_call.1} parent=1 // pred_fallthru
      _
    // Predicated region
    $region26: #{tpu_custom_call.1} parent=1 // pred_check
      _
    $region27: #{tpu_custom_call.1} parent=1 // pred_check_branch
      %80 = sbr.rel (0) target = $region29
    $region28: #{tpu_custom_call.1} parent=1 // pred_region
      %82 = dma.done [#allocation3], 128
    $region29: #{tpu_custom_call.1} parent=1 // pred_fallthru
      _
    // Predicated region
    $region30: #{tpu_custom_call.1} parent=1 // pred_check
      _
    $region31: #{tpu_custom_call.1} parent=1 // pred_check_branch
      %84 = sbr.rel (0) target = $region33
    $region32: #{tpu_custom_call.1} parent=1 // pred_region
      %86 = dma.done [#allocation5], 128
    $region33: #{tpu_custom_call.1} parent=1 // pred_fallthru
      _
    // Predicated region
    $region34: #{tpu_custom_call.1} parent=1 // pred_check
      _
    $region35: #{tpu_custom_call.1} parent=1 // pred_check_branch
      %88 = sbr.rel (0) target = $region37
    $region36: #{tpu_custom_call.1} parent=1 // pred_region
      %90 = dma.done [#allocation5], 16384
    $region37: #{tpu_custom_call.1} parent=1 // pred_fallthru
      _
    // Predicated region
    $region38: #{tpu_custom_call.1} parent=1 // pred_check
      _
    $region39: #{tpu_custom_call.1} parent=1 // pred_check_branch
      %92 = sbr.rel (0) target = $region41
    $region40: #{tpu_custom_call.1} parent=1 // pred_region
      %94 = dma.done [#allocation8], 256
    $region41: #{tpu_custom_call.1} parent=1 // pred_fallthru
      _
    // Predicated region
    $region42: #{tpu_custom_call.1} parent=1 // pred_check
      _
    $region43: #{tpu_custom_call.1} parent=1 // pred_check_branch
      %96 = sbr.rel (0) target = $region45
    $region44: #{tpu_custom_call.1} parent=1 // pred_region
      %98 = dma.done [#allocation8], 16384
    $region45: #{tpu_custom_call.1} parent=1 // pred_fallthru
      _
    %v99 = vld [vmem:[#allocation2] sm:$0xf]
    %v100 = vld [vmem:[#allocation2 + $0x4] sm:$0xf]
    %v101 = vld [vmem:[#allocation6] sm:$0xff]
    %v102 = vld [vmem:[#allocation6 + $0x8] sm:$0xff]
    %v103 = vld [vmem:[#allocation6 + $0x10] sm:$0xff]
    %v104 = vld [vmem:[#allocation6 + $0x18] sm:$0xff]
    %v105 = vld [vmem:[#allocation6 + $0x20] sm:$0xff]
    %v106 = vld [vmem:[#allocation6 + $0x28] sm:$0xff]
    %v107 = vld [vmem:[#allocation6 + $0x30] sm:$0xff]
    %v108 = vld [vmem:[#allocation6 + $0x38] sm:$0xff]
    %v109 = vld [vmem:[#allocation6 + $0x40] sm:$0xff]
    %v110 = vld [vmem:[#allocation6 + $0x48] sm:$0xff]
    %v111 = vld [vmem:[#allocation6 + $0x50] sm:$0xff]
    %v112 = vld [vmem:[#allocation6 + $0x58] sm:$0xff]
    %v113 = vld [vmem:[#allocation6 + $0x60] sm:$0xff]
    %v114 = vld [vmem:[#allocation6 + $0x68] sm:$0xff]
    %v115 = vld [vmem:[#allocation6 + $0x70] sm:$0xff]
    %v116 = vld [vmem:[#allocation6 + $0x78] sm:$0xff]
    %v117 = vld [vmem:[#allocation6 + $0x80] sm:$0xff]
    %v118 = vld [vmem:[#allocation6 + $0x88] sm:$0xff]
    %v119 = vld [vmem:[#allocation6 + $0x90] sm:$0xff]
    %v120 = vld [vmem:[#allocation6 + $0x98] sm:$0xff]
    %v121 = vld [vmem:[#allocation6 + $0xa0] sm:$0xff]
    %v122 = vld [vmem:[#allocation6 + $0xa8] sm:$0xff]
    %v123 = vld [vmem:[#allocation6 + $0xb0] sm:$0xff]
    %v124 = vld [vmem:[#allocation6 + $0xb8] sm:$0xff]
    %v125 = vld [vmem:[#allocation6 + $0xc0] sm:$0xff]
    %v126 = vld [vmem:[#allocation6 + $0xc8] sm:$0xff]
    %v127 = vld [vmem:[#allocation6 + $0xd0] sm:$0xff]
    %v128 = vld [vmem:[#allocation6 + $0xd8] sm:$0xff]
    %v129 = vld [vmem:[#allocation6 + $0xe0] sm:$0xff]
    %v130 = vld [vmem:[#allocation6 + $0xe8] sm:$0xff]
    %v131 = vld [vmem:[#allocation6 + $0xf0] sm:$0xff]
    %v132 = vld [vmem:[#allocation6 + $0xf8] sm:$0xff]
    %v133 = vld [vmem:[#allocation6 + $0x100] sm:$0xff]
    %v134 = vld [vmem:[#allocation6 + $0x108] sm:$0xff]
    %v135 = vld [vmem:[#allocation6 + $0x110] sm:$0xff]
    %v136 = vld [vmem:[#allocation6 + $0x118] sm:$0xff]
    %v137 = vld [vmem:[#allocation6 + $0x120] sm:$0xff]
    %v138 = vld [vmem:[#allocation6 + $0x128] sm:$0xff]
    %v139 = vld [vmem:[#allocation6 + $0x130] sm:$0xff]
    %v140 = vld [vmem:[#allocation6 + $0x138] sm:$0xff]
    %v141 = vld [vmem:[#allocation6 + $0x140] sm:$0xff]
    %v142 = vld [vmem:[#allocation6 + $0x148] sm:$0xff]
    %v143 = vld [vmem:[#allocation6 + $0x150] sm:$0xff]
    %v144 = vld [vmem:[#allocation6 + $0x158] sm:$0xff]
    %v145 = vld [vmem:[#allocation6 + $0x160] sm:$0xff]
    %v146 = vld [vmem:[#allocation6 + $0x168] sm:$0xff]
    %v147 = vld [vmem:[#allocation6 + $0x170] sm:$0xff]
    %v148 = vld [vmem:[#allocation6 + $0x178] sm:$0xff]
    %v149 = vld [vmem:[#allocation6 + $0x180] sm:$0xff]
    %v150 = vld [vmem:[#allocation6 + $0x188] sm:$0xff]
    %v151 = vld [vmem:[#allocation6 + $0x190] sm:$0xff]
    %v152 = vld [vmem:[#allocation6 + $0x198] sm:$0xff]
    %v153 = vld [vmem:[#allocation6 + $0x1a0] sm:$0xff]
    %v154 = vld [vmem:[#allocation6 + $0x1a8] sm:$0xff]
    %v155 = vld [vmem:[#allocation6 + $0x1b0] sm:$0xff]
    %v156 = vld [vmem:[#allocation6 + $0x1b8] sm:$0xff]
    %v157 = vld [vmem:[#allocation6 + $0x1c0] sm:$0xff]
    %v158 = vld [vmem:[#allocation6 + $0x1c8] sm:$0xff]
    %v159 = vld [vmem:[#allocation6 + $0x1d0] sm:$0xff]
    %v160 = vld [vmem:[#allocation6 + $0x1d8] sm:$0xff]
    %v161 = vld [vmem:[#allocation6 + $0x1e0] sm:$0xff]
    %v162 = vld [vmem:[#allocation6 + $0x1e8] sm:$0xff]
    %v163 = vld [vmem:[#allocation6 + $0x1f0] sm:$0xff]
    %v164 = vld [vmem:[#allocation6 + $0x1f8] sm:$0xff]
    %v165 = vld [vmem:[#allocation6 + $0x200] sm:$0xff]
    %v166 = vld [vmem:[#allocation6 + $0x208] sm:$0xff]
    %v167 = vld [vmem:[#allocation6 + $0x210] sm:$0xff]
    %v168 = vld [vmem:[#allocation6 + $0x218] sm:$0xff]
    %v169 = vld [vmem:[#allocation6 + $0x220] sm:$0xff]
    %v170 = vld [vmem:[#allocation6 + $0x228] sm:$0xff]
    %v171 = vld [vmem:[#allocation6 + $0x230] sm:$0xff]
    %v172 = vld [vmem:[#allocation6 + $0x238] sm:$0xff]
    %v173 = vld [vmem:[#allocation6 + $0x240] sm:$0xff]
    %v174 = vld [vmem:[#allocation6 + $0x248] sm:$0xff]
    %v175 = vld [vmem:[#allocation6 + $0x250] sm:$0xff]
    %v176 = vld [vmem:[#allocation6 + $0x258] sm:$0xff]
    %v177 = vld [vmem:[#allocation6 + $0x260] sm:$0xff]
    %v178 = vld [vmem:[#allocation6 + $0x268] sm:$0xff]
    %v179 = vld [vmem:[#allocation6 + $0x270] sm:$0xff]
    %v180 = vld [vmem:[#allocation6 + $0x278] sm:$0xff]
    %v181 = vld [vmem:[#allocation6 + $0x280] sm:$0xff]
    %v182 = vld [vmem:[#allocation6 + $0x288] sm:$0xff]
    %v183 = vld [vmem:[#allocation6 + $0x290] sm:$0xff]
    %v184 = vld [vmem:[#allocation6 + $0x298] sm:$0xff]
    %v185 = vld [vmem:[#allocation6 + $0x2a0] sm:$0xff]
    %v186 = vld [vmem:[#allocation6 + $0x2a8] sm:$0xff]
    %v187 = vld [vmem:[#allocation6 + $0x2b0] sm:$0xff]
    %v188 = vld [vmem:[#allocation6 + $0x2b8] sm:$0xff]
    %v189 = vld [vmem:[#allocation6 + $0x2c0] sm:$0xff]
    %v190 = vld [vmem:[#allocation6 + $0x2c8] sm:$0xff]
    %v191 = vld [vmem:[#allocation6 + $0x2d0] sm:$0xff]
    %v192 = vld [vmem:[#allocation6 + $0x2d8] sm:$0xff]
    %v193 = vld [vmem:[#allocation6 + $0x2e0] sm:$0xff]
    %v194 = vld [vmem:[#allocation6 + $0x2e8] sm:$0xff]
    %v195 = vld [vmem:[#allocation6 + $0x2f0] sm:$0xff]
    %v196 = vld [vmem:[#allocation6 + $0x2f8] sm:$0xff]
    %v197 = vld [vmem:[#allocation6 + $0x300] sm:$0xff]
    %v198 = vld [vmem:[#allocation6 + $0x308] sm:$0xff]
    %v199 = vld [vmem:[#allocation6 + $0x310] sm:$0xff]
    %v200 = vld [vmem:[#allocation6 + $0x318] sm:$0xff]
    %v201 = vld [vmem:[#allocation6 + $0x320] sm:$0xff]
    %v202 = vld [vmem:[#allocation6 + $0x328] sm:$0xff]
    %v203 = vld [vmem:[#allocation6 + $0x330] sm:$0xff]
    %v204 = vld [vmem:[#allocation6 + $0x338] sm:$0xff]
    %v205 = vld [vmem:[#allocation6 + $0x340] sm:$0xff]
    %v206 = vld [vmem:[#allocation6 + $0x348] sm:$0xff]
    %v207 = vld [vmem:[#allocation6 + $0x350] sm:$0xff]
    %v208 = vld [vmem:[#allocation6 + $0x358] sm:$0xff]
    %v209 = vld [vmem:[#allocation6 + $0x360] sm:$0xff]
    %v210 = vld [vmem:[#allocation6 + $0x368] sm:$0xff]
    %v211 = vld [vmem:[#allocation6 + $0x370] sm:$0xff]
    %v212 = vld [vmem:[#allocation6 + $0x378] sm:$0xff]
    %v213 = vld [vmem:[#allocation6 + $0x380] sm:$0xff]
    %v214 = vld [vmem:[#allocation6 + $0x388] sm:$0xff]
    %v215 = vld [vmem:[#allocation6 + $0x390] sm:$0xff]
    %v216 = vld [vmem:[#allocation6 + $0x398] sm:$0xff]
    %v217 = vld [vmem:[#allocation6 + $0x3a0] sm:$0xff]
    %v218 = vld [vmem:[#allocation6 + $0x3a8] sm:$0xff]
    %v219 = vld [vmem:[#allocation6 + $0x3b0] sm:$0xff]
    %v220 = vld [vmem:[#allocation6 + $0x3b8] sm:$0xff]
    %v221 = vld [vmem:[#allocation6 + $0x3c0] sm:$0xff]
    %v222 = vld [vmem:[#allocation6 + $0x3c8] sm:$0xff]
    %v223 = vld [vmem:[#allocation6 + $0x3d0] sm:$0xff]
    %v224 = vld [vmem:[#allocation6 + $0x3d8] sm:$0xff]
    %v225 = vld [vmem:[#allocation6 + $0x3e0] sm:$0xff]
    %v226 = vld [vmem:[#allocation6 + $0x3e8] sm:$0xff]
    %v227 = vld [vmem:[#allocation6 + $0x3f0] sm:$0xff]
    %v228 = vld [vmem:[#allocation6 + $0x3f8] sm:$0xff]
    %v229 = vld [vmem:[#allocation7] sm:$0xff]
    %v230 = vld [vmem:[#allocation7 + $0x8] sm:$0xff]
    %v233 = vperm.slane %v229, 0
    %v234 = vperm.slane %v229, 1
    %v235 = vperm.slane %v229, 2
    %v236 = vperm.slane %v229, 3
    %v237 = vperm.slane %v229, 4
    %v238 = vperm.slane %v229, 5
    %v239 = vperm.slane %v229, 6
    %v240 = vperm.slane %v229, 7
    %v241 = vperm.slane %v230, 0
    %v242 = vperm.slane %v230, 1
    %v243 = vperm.slane %v230, 2
    %v244 = vperm.slane %v230, 3
    %v245 = vperm.slane %v230, 4
    %v246 = vperm.slane %v230, 5
    %v247 = vperm.slane %v230, 6
    %v248 = vperm.slane %v230, 7
    %v267 = vunpack.c.l.b16 %v99
    %v268 = vunpack.c.l.b16 %v100
    %v269 = vpack.c.b16 %v268, %v267
    %v399 = vunpack.c.l.b16 %v101
    %v400 = vunpack.c.h.b16 %v101
    %v401 = vunpack.c.l.b16 %v102
    %v402 = vunpack.c.h.b16 %v102
    %v403 = vunpack.c.l.b16 %v103
    %v404 = vunpack.c.h.b16 %v103
    %v405 = vunpack.c.l.b16 %v104
    %v406 = vunpack.c.h.b16 %v104
    %v407 = vunpack.c.l.b16 %v105
    %v408 = vunpack.c.h.b16 %v105
    %v409 = vunpack.c.l.b16 %v106
    %v410 = vunpack.c.h.b16 %v106
    %v411 = vunpack.c.l.b16 %v107
    %v412 = vunpack.c.h.b16 %v107
    %v413 = vunpack.c.l.b16 %v108
    %v414 = vunpack.c.h.b16 %v108
    %v415 = vunpack.c.l.b16 %v109
    %v416 = vunpack.c.h.b16 %v109
    %v417 = vunpack.c.l.b16 %v110
    %v418 = vunpack.c.h.b16 %v110
    %v419 = vunpack.c.l.b16 %v111
    %v420 = vunpack.c.h.b16 %v111
    %v421 = vunpack.c.l.b16 %v112
    %v422 = vunpack.c.h.b16 %v112
    %v423 = vunpack.c.l.b16 %v113
    %v424 = vunpack.c.h.b16 %v113
    %v425 = vunpack.c.l.b16 %v114
    %v426 = vunpack.c.h.b16 %v114
    %v427 = vunpack.c.l.b16 %v115
    %v428 = vunpack.c.h.b16 %v115
    %v429 = vunpack.c.l.b16 %v116
    %v430 = vunpack.c.h.b16 %v116
    %v431 = vunpack.c.l.b16 %v117
    %v432 = vunpack.c.h.b16 %v117
    %v433 = vunpack.c.l.b16 %v118
    %v434 = vunpack.c.h.b16 %v118
    %v435 = vunpack.c.l.b16 %v119
    %v436 = vunpack.c.h.b16 %v119
    %v437 = vunpack.c.l.b16 %v120
    %v438 = vunpack.c.h.b16 %v120
    %v439 = vunpack.c.l.b16 %v121
    %v440 = vunpack.c.h.b16 %v121
    %v441 = vunpack.c.l.b16 %v122
    %v442 = vunpack.c.h.b16 %v122
    %v443 = vunpack.c.l.b16 %v123
    %v444 = vunpack.c.h.b16 %v123
    %v445 = vunpack.c.l.b16 %v124
    %v446 = vunpack.c.h.b16 %v124
    %v447 = vunpack.c.l.b16 %v125
    %v448 = vunpack.c.h.b16 %v125
    %v449 = vunpack.c.l.b16 %v126
    %v450 = vunpack.c.h.b16 %v126
    %v451 = vunpack.c.l.b16 %v127
    %v452 = vunpack.c.h.b16 %v127
    %v453 = vunpack.c.l.b16 %v128
    %v454 = vunpack.c.h.b16 %v128
    %v455 = vunpack.c.l.b16 %v129
    %v456 = vunpack.c.h.b16 %v129
    %v457 = vunpack.c.l.b16 %v130
    %v458 = vunpack.c.h.b16 %v130
    %v459 = vunpack.c.l.b16 %v131
    %v460 = vunpack.c.h.b16 %v131
    %v461 = vunpack.c.l.b16 %v132
    %v462 = vunpack.c.h.b16 %v132
    %v463 = vunpack.c.l.b16 %v133
    %v464 = vunpack.c.h.b16 %v133
    %v465 = vunpack.c.l.b16 %v134
    %v466 = vunpack.c.h.b16 %v134
    %v467 = vunpack.c.l.b16 %v135
    %v468 = vunpack.c.h.b16 %v135
    %v469 = vunpack.c.l.b16 %v136
    %v470 = vunpack.c.h.b16 %v136
    %v471 = vunpack.c.l.b16 %v137
    %v472 = vunpack.c.h.b16 %v137
    %v473 = vunpack.c.l.b16 %v138
    %v474 = vunpack.c.h.b16 %v138
    %v475 = vunpack.c.l.b16 %v139
    %v476 = vunpack.c.h.b16 %v139
    %v477 = vunpack.c.l.b16 %v140
    %v478 = vunpack.c.h.b16 %v140
    %v479 = vunpack.c.l.b16 %v141
    %v480 = vunpack.c.h.b16 %v141
    %v481 = vunpack.c.l.b16 %v142
    %v482 = vunpack.c.h.b16 %v142
    %v483 = vunpack.c.l.b16 %v143
    %v484 = vunpack.c.h.b16 %v143
    %v485 = vunpack.c.l.b16 %v144
    %v486 = vunpack.c.h.b16 %v144
    %v487 = vunpack.c.l.b16 %v145
    %v488 = vunpack.c.h.b16 %v145
    %v489 = vunpack.c.l.b16 %v146
    %v490 = vunpack.c.h.b16 %v146
    %v491 = vunpack.c.l.b16 %v147
    %v492 = vunpack.c.h.b16 %v147
    %v493 = vunpack.c.l.b16 %v148
    %v494 = vunpack.c.h.b16 %v148
    %v495 = vunpack.c.l.b16 %v149
    %v496 = vunpack.c.h.b16 %v149
    %v497 = vunpack.c.l.b16 %v150
    %v498 = vunpack.c.h.b16 %v150
    %v499 = vunpack.c.l.b16 %v151
    %v500 = vunpack.c.h.b16 %v151
    %v501 = vunpack.c.l.b16 %v152
    %v502 = vunpack.c.h.b16 %v152
    %v503 = vunpack.c.l.b16 %v153
    %v504 = vunpack.c.h.b16 %v153
    %v505 = vunpack.c.l.b16 %v154
    %v506 = vunpack.c.h.b16 %v154
    %v507 = vunpack.c.l.b16 %v155
    %v508 = vunpack.c.h.b16 %v155
    %v509 = vunpack.c.l.b16 %v156
    %v510 = vunpack.c.h.b16 %v156
    %v511 = vunpack.c.l.b16 %v157
    %v512 = vunpack.c.h.b16 %v157
    %v513 = vunpack.c.l.b16 %v158
    %v514 = vunpack.c.h.b16 %v158
    %v515 = vunpack.c.l.b16 %v159
    %v516 = vunpack.c.h.b16 %v159
    %v517 = vunpack.c.l.b16 %v160
    %v518 = vunpack.c.h.b16 %v160
    %v519 = vunpack.c.l.b16 %v161
    %v520 = vunpack.c.h.b16 %v161
    %v521 = vunpack.c.l.b16 %v162
    %v522 = vunpack.c.h.b16 %v162
    %v523 = vunpack.c.l.b16 %v163
    %v524 = vunpack.c.h.b16 %v163
    %v525 = vunpack.c.l.b16 %v164
    %v526 = vunpack.c.h.b16 %v164
    %v527 = vunpack.c.l.b16 %v165
    %v528 = vunpack.c.h.b16 %v165
    %v529 = vunpack.c.l.b16 %v166
    %v530 = vunpack.c.h.b16 %v166
    %v531 = vunpack.c.l.b16 %v167
    %v532 = vunpack.c.h.b16 %v167
    %v533 = vunpack.c.l.b16 %v168
    %v534 = vunpack.c.h.b16 %v168
    %v535 = vunpack.c.l.b16 %v169
    %v536 = vunpack.c.h.b16 %v169
    %v537 = vunpack.c.l.b16 %v170
    %v538 = vunpack.c.h.b16 %v170
    %v539 = vunpack.c.l.b16 %v171
    %v540 = vunpack.c.h.b16 %v171
    %v541 = vunpack.c.l.b16 %v172
    %v542 = vunpack.c.h.b16 %v172
    %v543 = vunpack.c.l.b16 %v173
    %v544 = vunpack.c.h.b16 %v173
    %v545 = vunpack.c.l.b16 %v174
    %v546 = vunpack.c.h.b16 %v174
    %v547 = vunpack.c.l.b16 %v175
    %v548 = vunpack.c.h.b16 %v175
    %v549 = vunpack.c.l.b16 %v176
    %v550 = vunpack.c.h.b16 %v176
    %v551 = vunpack.c.l.b16 %v177
    %v552 = vunpack.c.h.b16 %v177
    %v553 = vunpack.c.l.b16 %v178
    %v554 = vunpack.c.h.b16 %v178
    %v555 = vunpack.c.l.b16 %v179
    %v556 = vunpack.c.h.b16 %v179
    %v557 = vunpack.c.l.b16 %v180
    %v558 = vunpack.c.h.b16 %v180
    %v559 = vunpack.c.l.b16 %v181
    %v560 = vunpack.c.h.b16 %v181
    %v561 = vunpack.c.l.b16 %v182
    %v562 = vunpack.c.h.b16 %v182
    %v563 = vunpack.c.l.b16 %v183
    %v564 = vunpack.c.h.b16 %v183
    %v565 = vunpack.c.l.b16 %v184
    %v566 = vunpack.c.h.b16 %v184
    %v567 = vunpack.c.l.b16 %v185
    %v568 = vunpack.c.h.b16 %v185
    %v569 = vunpack.c.l.b16 %v186
    %v570 = vunpack.c.h.b16 %v186
    %v571 = vunpack.c.l.b16 %v187
    %v572 = vunpack.c.h.b16 %v187
    %v573 = vunpack.c.l.b16 %v188
    %v574 = vunpack.c.h.b16 %v188
    %v575 = vunpack.c.l.b16 %v189
    %v576 = vunpack.c.h.b16 %v189
    %v577 = vunpack.c.l.b16 %v190
    %v578 = vunpack.c.h.b16 %v190
    %v579 = vunpack.c.l.b16 %v191
    %v580 = vunpack.c.h.b16 %v191
    %v581 = vunpack.c.l.b16 %v192
    %v582 = vunpack.c.h.b16 %v192
    %v583 = vunpack.c.l.b16 %v193
    %v584 = vunpack.c.h.b16 %v193
    %v585 = vunpack.c.l.b16 %v194
    %v586 = vunpack.c.h.b16 %v194
    %v587 = vunpack.c.l.b16 %v195
    %v588 = vunpack.c.h.b16 %v195
    %v589 = vunpack.c.l.b16 %v196
    %v590 = vunpack.c.h.b16 %v196
    %v591 = vunpack.c.l.b16 %v197
    %v592 = vunpack.c.h.b16 %v197
    %v593 = vunpack.c.l.b16 %v198
    %v594 = vunpack.c.h.b16 %v198
    %v595 = vunpack.c.l.b16 %v199
    %v596 = vunpack.c.h.b16 %v199
    %v597 = vunpack.c.l.b16 %v200
    %v598 = vunpack.c.h.b16 %v200
    %v599 = vunpack.c.l.b16 %v201
    %v600 = vunpack.c.h.b16 %v201
    %v601 = vunpack.c.l.b16 %v202
    %v602 = vunpack.c.h.b16 %v202
    %v603 = vunpack.c.l.b16 %v203
    %v604 = vunpack.c.h.b16 %v203
    %v605 = vunpack.c.l.b16 %v204
    %v606 = vunpack.c.h.b16 %v204
    %v607 = vunpack.c.l.b16 %v205
    %v608 = vunpack.c.h.b16 %v205
    %v609 = vunpack.c.l.b16 %v206
    %v610 = vunpack.c.h.b16 %v206
    %v611 = vunpack.c.l.b16 %v207
    %v612 = vunpack.c.h.b16 %v207
    %v613 = vunpack.c.l.b16 %v208
    %v614 = vunpack.c.h.b16 %v208
    %v615 = vunpack.c.l.b16 %v209
    %v616 = vunpack.c.h.b16 %v209
    %v617 = vunpack.c.l.b16 %v210
    %v618 = vunpack.c.h.b16 %v210
    %v619 = vunpack.c.l.b16 %v211
    %v620 = vunpack.c.h.b16 %v211
    %v621 = vunpack.c.l.b16 %v212
    %v622 = vunpack.c.h.b16 %v212
    %v623 = vunpack.c.l.b16 %v213
    %v624 = vunpack.c.h.b16 %v213
    %v625 = vunpack.c.l.b16 %v214
    %v626 = vunpack.c.h.b16 %v214
    %v627 = vunpack.c.l.b16 %v215
    %v628 = vunpack.c.h.b16 %v215
    %v629 = vunpack.c.l.b16 %v216
    %v630 = vunpack.c.h.b16 %v216
    %v631 = vunpack.c.l.b16 %v217
    %v632 = vunpack.c.h.b16 %v217
    %v633 = vunpack.c.l.b16 %v218
    %v634 = vunpack.c.h.b16 %v218
    %v635 = vunpack.c.l.b16 %v219
    %v636 = vunpack.c.h.b16 %v219
    %v637 = vunpack.c.l.b16 %v220
    %v638 = vunpack.c.h.b16 %v220
    %v639 = vunpack.c.l.b16 %v221
    %v640 = vunpack.c.h.b16 %v221
    %v641 = vunpack.c.l.b16 %v222
    %v642 = vunpack.c.h.b16 %v222
    %v643 = vunpack.c.l.b16 %v223
    %v644 = vunpack.c.h.b16 %v223
    %v645 = vunpack.c.l.b16 %v224
    %v646 = vunpack.c.h.b16 %v224
    %v647 = vunpack.c.l.b16 %v225
    %v648 = vunpack.c.h.b16 %v225
    %v649 = vunpack.c.l.b16 %v226
    %v650 = vunpack.c.h.b16 %v226
    %v651 = vunpack.c.l.b16 %v227
    %v652 = vunpack.c.h.b16 %v227
    %v653 = vunpack.c.l.b16 %v228
    %v654 = vunpack.c.h.b16 %v228
    %v655 = vpack.c.b16 %v415, %v399
    %v656 = vpack.c.b16 %v416, %v400
    %v657 = vpack.c.b16 %v417, %v401
    %v658 = vpack.c.b16 %v418, %v402
    %v659 = vpack.c.b16 %v419, %v403
    %v660 = vpack.c.b16 %v420, %v404
    %v661 = vpack.c.b16 %v421, %v405
    %v662 = vpack.c.b16 %v422, %v406
    %v663 = vpack.c.b16 %v423, %v407
    %v664 = vpack.c.b16 %v424, %v408
    %v665 = vpack.c.b16 %v425, %v409
    %v666 = vpack.c.b16 %v426, %v410
    %v667 = vpack.c.b16 %v427, %v411
    %v668 = vpack.c.b16 %v428, %v412
    %v669 = vpack.c.b16 %v429, %v413
    %v670 = vpack.c.b16 %v430, %v414
    %v671 = vpack.c.b16 %v447, %v431
    %v672 = vpack.c.b16 %v448, %v432
    %v673 = vpack.c.b16 %v449, %v433
    %v674 = vpack.c.b16 %v450, %v434
    %v675 = vpack.c.b16 %v451, %v435
    %v676 = vpack.c.b16 %v452, %v436
    %v677 = vpack.c.b16 %v453, %v437
    %v678 = vpack.c.b16 %v454, %v438
    %v679 = vpack.c.b16 %v455, %v439
    %v680 = vpack.c.b16 %v456, %v440
    %v681 = vpack.c.b16 %v457, %v441
    %v682 = vpack.c.b16 %v458, %v442
    %v683 = vpack.c.b16 %v459, %v443
    %v684 = vpack.c.b16 %v460, %v444
    %v685 = vpack.c.b16 %v461, %v445
    %v686 = vpack.c.b16 %v462, %v446
    %v687 = vpack.c.b16 %v479, %v463
    %v688 = vpack.c.b16 %v480, %v464
    %v689 = vpack.c.b16 %v481, %v465
    %v690 = vpack.c.b16 %v482, %v466
    %v691 = vpack.c.b16 %v483, %v467
    %v692 = vpack.c.b16 %v484, %v468
    %v693 = vpack.c.b16 %v485, %v469
    %v694 = vpack.c.b16 %v486, %v470
    %v695 = vpack.c.b16 %v487, %v471
    %v696 = vpack.c.b16 %v488, %v472
    %v697 = vpack.c.b16 %v489, %v473
    %v698 = vpack.c.b16 %v490, %v474
    %v699 = vpack.c.b16 %v491, %v475
    %v700 = vpack.c.b16 %v492, %v476
    %v701 = vpack.c.b16 %v493, %v477
    %v702 = vpack.c.b16 %v494, %v478
    %v703 = vpack.c.b16 %v511, %v495
    %v704 = vpack.c.b16 %v512, %v496
    %v705 = vpack.c.b16 %v513, %v497
    %v706 = vpack.c.b16 %v514, %v498
    %v707 = vpack.c.b16 %v515, %v499
    %v708 = vpack.c.b16 %v516, %v500
    %v709 = vpack.c.b16 %v517, %v501
    %v710 = vpack.c.b16 %v518, %v502
    %v711 = vpack.c.b16 %v519, %v503
    %v712 = vpack.c.b16 %v520, %v504
    %v713 = vpack.c.b16 %v521, %v505
    %v714 = vpack.c.b16 %v522, %v506
    %v715 = vpack.c.b16 %v523, %v507
    %v716 = vpack.c.b16 %v524, %v508
    %v717 = vpack.c.b16 %v525, %v509
    %v718 = vpack.c.b16 %v526, %v510
    %v719 = vpack.c.b16 %v543, %v527
    %v720 = vpack.c.b16 %v544, %v528
    %v721 = vpack.c.b16 %v545, %v529
    %v722 = vpack.c.b16 %v546, %v530
    %v723 = vpack.c.b16 %v547, %v531
    %v724 = vpack.c.b16 %v548, %v532
    %v725 = vpack.c.b16 %v549, %v533
    %v726 = vpack.c.b16 %v550, %v534
    %v727 = vpack.c.b16 %v551, %v535
    %v728 = vpack.c.b16 %v552, %v536
    %v729 = vpack.c.b16 %v553, %v537
    %v730 = vpack.c.b16 %v554, %v538
    %v731 = vpack.c.b16 %v555, %v539
    %v732 = vpack.c.b16 %v556, %v540
    %v733 = vpack.c.b16 %v557, %v541
    %v734 = vpack.c.b16 %v558, %v542
    %v735 = vpack.c.b16 %v575, %v559
    %v736 = vpack.c.b16 %v576, %v560
    %v737 = vpack.c.b16 %v577, %v561
    %v738 = vpack.c.b16 %v578, %v562
    %v739 = vpack.c.b16 %v579, %v563
    %v740 = vpack.c.b16 %v580, %v564
    %v741 = vpack.c.b16 %v581, %v565
    %v742 = vpack.c.b16 %v582, %v566
    %v743 = vpack.c.b16 %v583, %v567
    %v744 = vpack.c.b16 %v584, %v568
    %v745 = vpack.c.b16 %v585, %v569
    %v746 = vpack.c.b16 %v586, %v570
    %v747 = vpack.c.b16 %v587, %v571
    %v748 = vpack.c.b16 %v588, %v572
    %v749 = vpack.c.b16 %v589, %v573
    %v750 = vpack.c.b16 %v590, %v574
    %v751 = vpack.c.b16 %v607, %v591
    %v752 = vpack.c.b16 %v608, %v592
    %v753 = vpack.c.b16 %v609, %v593
    %v754 = vpack.c.b16 %v610, %v594
    %v755 = vpack.c.b16 %v611, %v595
    %v756 = vpack.c.b16 %v612, %v596
    %v757 = vpack.c.b16 %v613, %v597
    %v758 = vpack.c.b16 %v614, %v598
    %v759 = vpack.c.b16 %v615, %v599
    %v760 = vpack.c.b16 %v616, %v600
    %v761 = vpack.c.b16 %v617, %v601
    %v762 = vpack.c.b16 %v618, %v602
    %v763 = vpack.c.b16 %v619, %v603
    %v764 = vpack.c.b16 %v620, %v604
    %v765 = vpack.c.b16 %v621, %v605
    %v766 = vpack.c.b16 %v622, %v606
    %v767 = vpack.c.b16 %v639, %v623
    %v768 = vpack.c.b16 %v640, %v624
    %v769 = vpack.c.b16 %v641, %v625
    %v770 = vpack.c.b16 %v642, %v626
    %v771 = vpack.c.b16 %v643, %v627
    %v772 = vpack.c.b16 %v644, %v628
    %v773 = vpack.c.b16 %v645, %v629
    %v774 = vpack.c.b16 %v646, %v630
    %v775 = vpack.c.b16 %v647, %v631
    %v776 = vpack.c.b16 %v648, %v632
    %v777 = vpack.c.b16 %v649, %v633
    %v778 = vpack.c.b16 %v650, %v634
    %v779 = vpack.c.b16 %v651, %v635
    %v780 = vpack.c.b16 %v652, %v636
    %v781 = vpack.c.b16 %v653, %v637
    %v782 = vpack.c.b16 %v654, %v638
    %911 = vmatpush.bf16.msra.mxu0 %v767
    %912 = vmatpush.bf16.msra.mxu0 %v751
    %913 = vmatpush.bf16.msra.mxu0 %v735
    %914 = vmatpush.bf16.msra.mxu0 %v719
    %915 = vmatpush.bf16.msra.mxu0 %v703
    %916 = vmatpush.bf16.msra.mxu0 %v687
    %917 = vmatpush.bf16.msra.mxu0 %v671
    %918 = vmatpush.bf16.msra.mxu0 %v655
    %919 = vmatmul.bf16.gmra.mxu0 %v269
    %v920 = vpop.f32.mrf.mxu0
    %v921 = vadd.f32 %v233, %v920
    %v922 = vpop.f32.mrf.mxu0
    %v923 = vadd.f32 %v233, %v922
    %924 = vdwg.mxu0
    %925 = vmatpush.bf16.msra.mxu0 %v768
    %926 = vmatpush.bf16.msra.mxu0 %v752
    %927 = vmatpush.bf16.msra.mxu0 %v736
    %928 = vmatpush.bf16.msra.mxu0 %v720
    %929 = vmatpush.bf16.msra.mxu0 %v704
    %930 = vmatpush.bf16.msra.mxu0 %v688
    %931 = vmatpush.bf16.msra.mxu0 %v672
    %932 = vmatpush.bf16.msra.mxu0 %v656
    %933 = vmatmul.bf16.gmra.mxu0 %v269
    %v934 = vpop.f32.mrf.mxu0
    %v935 = vadd.f32 %v234, %v934
    %v936 = vpop.f32.mrf.mxu0
    %v937 = vadd.f32 %v234, %v936
    %938 = vdwg.mxu0
    %939 = vmatpush.bf16.msra.mxu0 %v769
    %940 = vmatpush.bf16.msra.mxu0 %v753
    %941 = vmatpush.bf16.msra.mxu0 %v737
    %942 = vmatpush.bf16.msra.mxu0 %v721
    %943 = vmatpush.bf16.msra.mxu0 %v705
    %944 = vmatpush.bf16.msra.mxu0 %v689
    %945 = vmatpush.bf16.msra.mxu0 %v673
    %946 = vmatpush.bf16.msra.mxu0 %v657
    %947 = vmatmul.bf16.gmra.mxu0 %v269
    %v948 = vpop.f32.mrf.mxu0
    %v949 = vadd.f32 %v235, %v948
    %v950 = vpop.f32.mrf.mxu0
    %v951 = vadd.f32 %v235, %v950
    %952 = vdwg.mxu0
    %953 = vmatpush.bf16.msra.mxu0 %v770
    %954 = vmatpush.bf16.msra.mxu0 %v754
    %955 = vmatpush.bf16.msra.mxu0 %v738
    %956 = vmatpush.bf16.msra.mxu0 %v722
    %957 = vmatpush.bf16.msra.mxu0 %v706
    %958 = vmatpush.bf16.msra.mxu0 %v690
    %959 = vmatpush.bf16.msra.mxu0 %v674
    %960 = vmatpush.bf16.msra.mxu0 %v658
    %961 = vmatmul.bf16.gmra.mxu0 %v269
    %v962 = vpop.f32.mrf.mxu0
    %v963 = vadd.f32 %v236, %v962
    %v964 = vpop.f32.mrf.mxu0
    %v965 = vadd.f32 %v236, %v964
    %966 = vdwg.mxu0
    %967 = vmatpush.bf16.msra.mxu0 %v771
    %968 = vmatpush.bf16.msra.mxu0 %v755
    %969 = vmatpush.bf16.msra.mxu0 %v739
    %970 = vmatpush.bf16.msra.mxu0 %v723
    %971 = vmatpush.bf16.msra.mxu0 %v707
    %972 = vmatpush.bf16.msra.mxu0 %v691
    %973 = vmatpush.bf16.msra.mxu0 %v675
    %974 = vmatpush.bf16.msra.mxu0 %v659
    %975 = vmatmul.bf16.gmra.mxu0 %v269
    %v976 = vpop.f32.mrf.mxu0
    %v977 = vadd.f32 %v237, %v976
    %v978 = vpop.f32.mrf.mxu0
    %v979 = vadd.f32 %v237, %v978
    %980 = vdwg.mxu0
    %981 = vmatpush.bf16.msra.mxu0 %v772
    %982 = vmatpush.bf16.msra.mxu0 %v756
    %983 = vmatpush.bf16.msra.mxu0 %v740
    %984 = vmatpush.bf16.msra.mxu0 %v724
    %985 = vmatpush.bf16.msra.mxu0 %v708
    %986 = vmatpush.bf16.msra.mxu0 %v692
    %987 = vmatpush.bf16.msra.mxu0 %v676
    %988 = vmatpush.bf16.msra.mxu0 %v660
    %989 = vmatmul.bf16.gmra.mxu0 %v269
    %v990 = vpop.f32.mrf.mxu0
    %v991 = vadd.f32 %v238, %v990
    %v992 = vpop.f32.mrf.mxu0
    %v993 = vadd.f32 %v238, %v992
    %994 = vdwg.mxu0
    %995 = vmatpush.bf16.msra.mxu0 %v773
    %996 = vmatpush.bf16.msra.mxu0 %v757
    %997 = vmatpush.bf16.msra.mxu0 %v741
    %998 = vmatpush.bf16.msra.mxu0 %v725
    %999 = vmatpush.bf16.msra.mxu0 %v709
    %1000 = vmatpush.bf16.msra.mxu0 %v693
    %1001 = vmatpush.bf16.msra.mxu0 %v677
    %1002 = vmatpush.bf16.msra.mxu0 %v661
    %1003 = vmatmul.bf16.gmra.mxu0 %v269
    %v1004 = vpop.f32.mrf.mxu0
    %v1005 = vadd.f32 %v239, %v1004
    %v1006 = vpop.f32.mrf.mxu0
    %v1007 = vadd.f32 %v239, %v1006
    %1008 = vdwg.mxu0
    %1009 = vmatpush.bf16.msra.mxu0 %v774
    %1010 = vmatpush.bf16.msra.mxu0 %v758
    %1011 = vmatpush.bf16.msra.mxu0 %v742
    %1012 = vmatpush.bf16.msra.mxu0 %v726
    %1013 = vmatpush.bf16.msra.mxu0 %v710
    %1014 = vmatpush.bf16.msra.mxu0 %v694
    %1015 = vmatpush.bf16.msra.mxu0 %v678
    %1016 = vmatpush.bf16.msra.mxu0 %v662
    %1017 = vmatmul.bf16.gmra.mxu0 %v269
    %v1018 = vpop.f32.mrf.mxu0
    %v1019 = vadd.f32 %v240, %v1018
    %v1020 = vpop.f32.mrf.mxu0
    %v1021 = vadd.f32 %v240, %v1020
    %1022 = vdwg.mxu0
    %1023 = vmatpush.bf16.msra.mxu0 %v775
    %1024 = vmatpush.bf16.msra.mxu0 %v759
    %1025 = vmatpush.bf16.msra.mxu0 %v743
    %1026 = vmatpush.bf16.msra.mxu0 %v727
    %1027 = vmatpush.bf16.msra.mxu0 %v711
    %1028 = vmatpush.bf16.msra.mxu0 %v695
    %1029 = vmatpush.bf16.msra.mxu0 %v679
    %1030 = vmatpush.bf16.msra.mxu0 %v663
    %1031 = vmatmul.bf16.gmra.mxu0 %v269
    %v1032 = vpop.f32.mrf.mxu0
    %v1033 = vadd.f32 %v241, %v1032
    %v1034 = vpop.f32.mrf.mxu0
    %v1035 = vadd.f32 %v241, %v1034
    %1036 = vdwg.mxu0
    %1037 = vmatpush.bf16.msra.mxu0 %v776
    %1038 = vmatpush.bf16.msra.mxu0 %v760
    %1039 = vmatpush.bf16.msra.mxu0 %v744
    %1040 = vmatpush.bf16.msra.mxu0 %v728
    %1041 = vmatpush.bf16.msra.mxu0 %v712
    %1042 = vmatpush.bf16.msra.mxu0 %v696
    %1043 = vmatpush.bf16.msra.mxu0 %v680
    %1044 = vmatpush.bf16.msra.mxu0 %v664
    %1045 = vmatmul.bf16.gmra.mxu0 %v269
    %v1046 = vpop.f32.mrf.mxu0
    %v1047 = vadd.f32 %v242, %v1046
    %v1048 = vpop.f32.mrf.mxu0
    %v1049 = vadd.f32 %v242, %v1048
    %1050 = vdwg.mxu0
    %1051 = vmatpush.bf16.msra.mxu0 %v777
    %1052 = vmatpush.bf16.msra.mxu0 %v761
    %1053 = vmatpush.bf16.msra.mxu0 %v745
    %1054 = vmatpush.bf16.msra.mxu0 %v729
    %1055 = vmatpush.bf16.msra.mxu0 %v713
    %1056 = vmatpush.bf16.msra.mxu0 %v697
    %1057 = vmatpush.bf16.msra.mxu0 %v681
    %1058 = vmatpush.bf16.msra.mxu0 %v665
    %1059 = vmatmul.bf16.gmra.mxu0 %v269
    %v1060 = vpop.f32.mrf.mxu0
    %v1061 = vadd.f32 %v243, %v1060
    %v1062 = vpop.f32.mrf.mxu0
    %v1063 = vadd.f32 %v243, %v1062
    %1064 = vdwg.mxu0
    %1065 = vmatpush.bf16.msra.mxu0 %v778
    %1066 = vmatpush.bf16.msra.mxu0 %v762
    %1067 = vmatpush.bf16.msra.mxu0 %v746
    %1068 = vmatpush.bf16.msra.mxu0 %v730
    %1069 = vmatpush.bf16.msra.mxu0 %v714
    %1070 = vmatpush.bf16.msra.mxu0 %v698
    %1071 = vmatpush.bf16.msra.mxu0 %v682
    %1072 = vmatpush.bf16.msra.mxu0 %v666
    %1073 = vmatmul.bf16.gmra.mxu0 %v269
    %v1074 = vpop.f32.mrf.mxu0
    %v1075 = vadd.f32 %v244, %v1074
    %v1076 = vpop.f32.mrf.mxu0
    %v1077 = vadd.f32 %v244, %v1076
    %1078 = vdwg.mxu0
    %1079 = vmatpush.bf16.msra.mxu0 %v779
    %1080 = vmatpush.bf16.msra.mxu0 %v763
    %1081 = vmatpush.bf16.msra.mxu0 %v747
    %1082 = vmatpush.bf16.msra.mxu0 %v731
    %1083 = vmatpush.bf16.msra.mxu0 %v715
    %1084 = vmatpush.bf16.msra.mxu0 %v699
    %1085 = vmatpush.bf16.msra.mxu0 %v683
    %1086 = vmatpush.bf16.msra.mxu0 %v667
    %1087 = vmatmul.bf16.gmra.mxu0 %v269
    %v1088 = vpop.f32.mrf.mxu0
    %v1089 = vadd.f32 %v245, %v1088
    %v1090 = vpop.f32.mrf.mxu0
    %v1091 = vadd.f32 %v245, %v1090
    %1092 = vdwg.mxu0
    %1093 = vmatpush.bf16.msra.mxu0 %v780
    %1094 = vmatpush.bf16.msra.mxu0 %v764
    %1095 = vmatpush.bf16.msra.mxu0 %v748
    %1096 = vmatpush.bf16.msra.mxu0 %v732
    %1097 = vmatpush.bf16.msra.mxu0 %v716
    %1098 = vmatpush.bf16.msra.mxu0 %v700
    %1099 = vmatpush.bf16.msra.mxu0 %v684
    %1100 = vmatpush.bf16.msra.mxu0 %v668
    %1101 = vmatmul.bf16.gmra.mxu0 %v269
    %v1102 = vpop.f32.mrf.mxu0
    %v1103 = vadd.f32 %v246, %v1102
    %v1104 = vpop.f32.mrf.mxu0
    %v1105 = vadd.f32 %v246, %v1104
    %1106 = vdwg.mxu0
    %1107 = vmatpush.bf16.msra.mxu0 %v781
    %1108 = vmatpush.bf16.msra.mxu0 %v765
    %1109 = vmatpush.bf16.msra.mxu0 %v749
    %1110 = vmatpush.bf16.msra.mxu0 %v733
    %1111 = vmatpush.bf16.msra.mxu0 %v717
    %1112 = vmatpush.bf16.msra.mxu0 %v701
    %1113 = vmatpush.bf16.msra.mxu0 %v685
    %1114 = vmatpush.bf16.msra.mxu0 %v669
    %1115 = vmatmul.bf16.gmra.mxu0 %v269
    %v1116 = vpop.f32.mrf.mxu0
    %v1117 = vadd.f32 %v247, %v1116
    %v1118 = vpop.f32.mrf.mxu0
    %v1119 = vadd.f32 %v247, %v1118
    %1120 = vdwg.mxu0
    %1121 = vmatpush.bf16.msra.mxu0 %v782
    %1122 = vmatpush.bf16.msra.mxu0 %v766
    %1123 = vmatpush.bf16.msra.mxu0 %v750
    %1124 = vmatpush.bf16.msra.mxu0 %v734
    %1125 = vmatpush.bf16.msra.mxu0 %v718
    %1126 = vmatpush.bf16.msra.mxu0 %v702
    %1127 = vmatpush.bf16.msra.mxu0 %v686
    %1128 = vmatpush.bf16.msra.mxu0 %v670
    %1129 = vmatmul.bf16.gmra.mxu0 %v269
    %v1130 = vpop.f32.mrf.mxu0
    %v1131 = vadd.f32 %v248, %v1130
    %v1132 = vpop.f32.mrf.mxu0
    %v1133 = vadd.f32 %v248, %v1132
    %1134 = vdwg.mxu0
    %v1135 = vmax.f32 %v921, 0.0
    %v1136 = vmax.f32 %v935, 0.0
    %v1137 = vmax.f32 %v949, 0.0
    %v1138 = vmax.f32 %v963, 0.0
    %v1139 = vmax.f32 %v977, 0.0
    %v1140 = vmax.f32 %v991, 0.0
    %v1141 = vmax.f32 %v1005, 0.0
    %v1142 = vmax.f32 %v1019, 0.0
    %v1143 = vmax.f32 %v1033, 0.0
    %v1144 = vmax.f32 %v1047, 0.0
    %v1145 = vmax.f32 %v1061, 0.0
    %v1146 = vmax.f32 %v1075, 0.0
    %v1147 = vmax.f32 %v1089, 0.0
    %v1148 = vmax.f32 %v1103, 0.0
    %v1149 = vmax.f32 %v1117, 0.0
    %v1150 = vmax.f32 %v1131, 0.0
    %v1151 = vmax.f32 %v923, 0.0
    %v1152 = vmax.f32 %v937, 0.0
    %v1153 = vmax.f32 %v951, 0.0
    %v1154 = vmax.f32 %v965, 0.0
    %v1155 = vmax.f32 %v979, 0.0
    %v1156 = vmax.f32 %v993, 0.0
    %v1157 = vmax.f32 %v1007, 0.0
    %v1158 = vmax.f32 %v1021, 0.0
    %v1159 = vmax.f32 %v1035, 0.0
    %v1160 = vmax.f32 %v1049, 0.0
    %v1161 = vmax.f32 %v1063, 0.0
    %v1162 = vmax.f32 %v1077, 0.0
    %v1163 = vmax.f32 %v1091, 0.0
    %v1164 = vmax.f32 %v1105, 0.0
    %v1165 = vmax.f32 %v1119, 0.0
    %v1166 = vmax.f32 %v1133, 0.0
    %v1167 = vpack.c.bf16 %v1151, %v1135
    %v1168 = vpack.c.bf16 %v1152, %v1136
    %v1169 = vpack.c.bf16 %v1153, %v1137
    %v1170 = vpack.c.bf16 %v1154, %v1138
    %v1171 = vpack.c.bf16 %v1155, %v1139
    %v1172 = vpack.c.bf16 %v1156, %v1140
    %v1173 = vpack.c.bf16 %v1157, %v1141
    %v1174 = vpack.c.bf16 %v1158, %v1142
    %v1175 = vpack.c.bf16 %v1159, %v1143
    %v1176 = vpack.c.bf16 %v1160, %v1144
    %v1177 = vpack.c.bf16 %v1161, %v1145
    %v1178 = vpack.c.bf16 %v1162, %v1146
    %v1179 = vpack.c.bf16 %v1163, %v1147
    %v1180 = vpack.c.bf16 %v1164, %v1148
    %v1181 = vpack.c.bf16 %v1165, %v1149
    %v1182 = vpack.c.bf16 %v1166, %v1150
    %v1183 = vld [vmem:[#allocation9] sm:$0xf]
    %v1184 = vld [vmem:[#allocation9 + $0x4] sm:$0xf]
    %v1185 = vld [vmem:[#allocation9 + $0x8] sm:$0xf]
    %v1186 = vld [vmem:[#allocation9 + $0xc] sm:$0xf]
    %v1187 = vld [vmem:[#allocation9 + $0x10] sm:$0xf]
    %v1188 = vld [vmem:[#allocation9 + $0x14] sm:$0xf]
    %v1189 = vld [vmem:[#allocation9 + $0x18] sm:$0xf]
    %v1190 = vld [vmem:[#allocation9 + $0x1c] sm:$0xf]
    %v1191 = vld [vmem:[#allocation9 + $0x20] sm:$0xf]
    %v1192 = vld [vmem:[#allocation9 + $0x24] sm:$0xf]
    %v1193 = vld [vmem:[#allocation9 + $0x28] sm:$0xf]
    %v1194 = vld [vmem:[#allocation9 + $0x2c] sm:$0xf]
    %v1195 = vld [vmem:[#allocation9 + $0x30] sm:$0xf]
    %v1196 = vld [vmem:[#allocation9 + $0x34] sm:$0xf]
    %v1197 = vld [vmem:[#allocation9 + $0x38] sm:$0xf]
    %v1198 = vld [vmem:[#allocation9 + $0x3c] sm:$0xf]
    %v1199 = vld [vmem:[#allocation9 + $0x40] sm:$0xf]
    %v1200 = vld [vmem:[#allocation9 + $0x44] sm:$0xf]
    %v1201 = vld [vmem:[#allocation9 + $0x48] sm:$0xf]
    %v1202 = vld [vmem:[#allocation9 + $0x4c] sm:$0xf]
    %v1203 = vld [vmem:[#allocation9 + $0x50] sm:$0xf]
    %v1204 = vld [vmem:[#allocation9 + $0x54] sm:$0xf]
    %v1205 = vld [vmem:[#allocation9 + $0x58] sm:$0xf]
    %v1206 = vld [vmem:[#allocation9 + $0x5c] sm:$0xf]
    %v1207 = vld [vmem:[#allocation9 + $0x60] sm:$0xf]
    %v1208 = vld [vmem:[#allocation9 + $0x64] sm:$0xf]
    %v1209 = vld [vmem:[#allocation9 + $0x68] sm:$0xf]
    %v1210 = vld [vmem:[#allocation9 + $0x6c] sm:$0xf]
    %v1211 = vld [vmem:[#allocation9 + $0x70] sm:$0xf]
    %v1212 = vld [vmem:[#allocation9 + $0x74] sm:$0xf]
    %v1213 = vld [vmem:[#allocation9 + $0x78] sm:$0xf]
    %v1214 = vld [vmem:[#allocation9 + $0x7c] sm:$0xf]
    %v1215 = vld [vmem:[#allocation9 + $0x80] sm:$0xf]
    %v1216 = vld [vmem:[#allocation9 + $0x84] sm:$0xf]
    %v1217 = vld [vmem:[#allocation9 + $0x88] sm:$0xf]
    %v1218 = vld [vmem:[#allocation9 + $0x8c] sm:$0xf]
    %v1219 = vld [vmem:[#allocation9 + $0x90] sm:$0xf]
    %v1220 = vld [vmem:[#allocation9 + $0x94] sm:$0xf]
    %v1221 = vld [vmem:[#allocation9 + $0x98] sm:$0xf]
    %v1222 = vld [vmem:[#allocation9 + $0x9c] sm:$0xf]
    %v1223 = vld [vmem:[#allocation9 + $0xa0] sm:$0xf]
    %v1224 = vld [vmem:[#allocation9 + $0xa4] sm:$0xf]
    %v1225 = vld [vmem:[#allocation9 + $0xa8] sm:$0xf]
    %v1226 = vld [vmem:[#allocation9 + $0xac] sm:$0xf]
    %v1227 = vld [vmem:[#allocation9 + $0xb0] sm:$0xf]
    %v1228 = vld [vmem:[#allocation9 + $0xb4] sm:$0xf]
    %v1229 = vld [vmem:[#allocation9 + $0xb8] sm:$0xf]
    %v1230 = vld [vmem:[#allocation9 + $0xbc] sm:$0xf]
    %v1231 = vld [vmem:[#allocation9 + $0xc0] sm:$0xf]
    %v1232 = vld [vmem:[#allocation9 + $0xc4] sm:$0xf]
    %v1233 = vld [vmem:[#allocation9 + $0xc8] sm:$0xf]
    %v1234 = vld [vmem:[#allocation9 + $0xcc] sm:$0xf]
    %v1235 = vld [vmem:[#allocation9 + $0xd0] sm:$0xf]
    %v1236 = vld [vmem:[#allocation9 + $0xd4] sm:$0xf]
    %v1237 = vld [vmem:[#allocation9 + $0xd8] sm:$0xf]
    %v1238 = vld [vmem:[#allocation9 + $0xdc] sm:$0xf]
    %v1239 = vld [vmem:[#allocation9 + $0xe0] sm:$0xf]
    %v1240 = vld [vmem:[#allocation9 + $0xe4] sm:$0xf]
    %v1241 = vld [vmem:[#allocation9 + $0xe8] sm:$0xf]
    %v1242 = vld [vmem:[#allocation9 + $0xec] sm:$0xf]
    %v1243 = vld [vmem:[#allocation9 + $0xf0] sm:$0xf]
    %v1244 = vld [vmem:[#allocation9 + $0xf4] sm:$0xf]
    %v1245 = vld [vmem:[#allocation9 + $0xf8] sm:$0xf]
    %v1246 = vld [vmem:[#allocation9 + $0xfc] sm:$0xf]
    %v1247 = vld [vmem:[#allocation9 + $0x100] sm:$0xf]
    %v1248 = vld [vmem:[#allocation9 + $0x104] sm:$0xf]
    %v1249 = vld [vmem:[#allocation9 + $0x108] sm:$0xf]
    %v1250 = vld [vmem:[#allocation9 + $0x10c] sm:$0xf]
    %v1251 = vld [vmem:[#allocation9 + $0x110] sm:$0xf]
    %v1252 = vld [vmem:[#allocation9 + $0x114] sm:$0xf]
    %v1253 = vld [vmem:[#allocation9 + $0x118] sm:$0xf]
    %v1254 = vld [vmem:[#allocation9 + $0x11c] sm:$0xf]
    %v1255 = vld [vmem:[#allocation9 + $0x120] sm:$0xf]
    %v1256 = vld [vmem:[#allocation9 + $0x124] sm:$0xf]
    %v1257 = vld [vmem:[#allocation9 + $0x128] sm:$0xf]
    %v1258 = vld [vmem:[#allocation9 + $0x12c] sm:$0xf]
    %v1259 = vld [vmem:[#allocation9 + $0x130] sm:$0xf]
    %v1260 = vld [vmem:[#allocation9 + $0x134] sm:$0xf]
    %v1261 = vld [vmem:[#allocation9 + $0x138] sm:$0xf]
    %v1262 = vld [vmem:[#allocation9 + $0x13c] sm:$0xf]
    %v1263 = vld [vmem:[#allocation9 + $0x140] sm:$0xf]
    %v1264 = vld [vmem:[#allocation9 + $0x144] sm:$0xf]
    %v1265 = vld [vmem:[#allocation9 + $0x148] sm:$0xf]
    %v1266 = vld [vmem:[#allocation9 + $0x14c] sm:$0xf]
    %v1267 = vld [vmem:[#allocation9 + $0x150] sm:$0xf]
    %v1268 = vld [vmem:[#allocation9 + $0x154] sm:$0xf]
    %v1269 = vld [vmem:[#allocation9 + $0x158] sm:$0xf]
    %v1270 = vld [vmem:[#allocation9 + $0x15c] sm:$0xf]
    %v1271 = vld [vmem:[#allocation9 + $0x160] sm:$0xf]
    %v1272 = vld [vmem:[#allocation9 + $0x164] sm:$0xf]
    %v1273 = vld [vmem:[#allocation9 + $0x168] sm:$0xf]
    %v1274 = vld [vmem:[#allocation9 + $0x16c] sm:$0xf]
    %v1275 = vld [vmem:[#allocation9 + $0x170] sm:$0xf]
    %v1276 = vld [vmem:[#allocation9 + $0x174] sm:$0xf]
    %v1277 = vld [vmem:[#allocation9 + $0x178] sm:$0xf]
    %v1278 = vld [vmem:[#allocation9 + $0x17c] sm:$0xf]
    %v1279 = vld [vmem:[#allocation9 + $0x180] sm:$0xf]
    %v1280 = vld [vmem:[#allocation9 + $0x184] sm:$0xf]
    %v1281 = vld [vmem:[#allocation9 + $0x188] sm:$0xf]
    %v1282 = vld [vmem:[#allocation9 + $0x18c] sm:$0xf]
    %v1283 = vld [vmem:[#allocation9 + $0x190] sm:$0xf]
    %v1284 = vld [vmem:[#allocation9 + $0x194] sm:$0xf]
    %v1285 = vld [vmem:[#allocation9 + $0x198] sm:$0xf]
    %v1286 = vld [vmem:[#allocation9 + $0x19c] sm:$0xf]
    %v1287 = vld [vmem:[#allocation9 + $0x1a0] sm:$0xf]
    %v1288 = vld [vmem:[#allocation9 + $0x1a4] sm:$0xf]
    %v1289 = vld [vmem:[#allocation9 + $0x1a8] sm:$0xf]
    %v1290 = vld [vmem:[#allocation9 + $0x1ac] sm:$0xf]
    %v1291 = vld [vmem:[#allocation9 + $0x1b0] sm:$0xf]
    %v1292 = vld [vmem:[#allocation9 + $0x1b4] sm:$0xf]
    %v1293 = vld [vmem:[#allocation9 + $0x1b8] sm:$0xf]
    %v1294 = vld [vmem:[#allocation9 + $0x1bc] sm:$0xf]
    %v1295 = vld [vmem:[#allocation9 + $0x1c0] sm:$0xf]
    %v1296 = vld [vmem:[#allocation9 + $0x1c4] sm:$0xf]
    %v1297 = vld [vmem:[#allocation9 + $0x1c8] sm:$0xf]
    %v1298 = vld [vmem:[#allocation9 + $0x1cc] sm:$0xf]
    %v1299 = vld [vmem:[#allocation9 + $0x1d0] sm:$0xf]
    %v1300 = vld [vmem:[#allocation9 + $0x1d4] sm:$0xf]
    %v1301 = vld [vmem:[#allocation9 + $0x1d8] sm:$0xf]
    %v1302 = vld [vmem:[#allocation9 + $0x1dc] sm:$0xf]
    %v1303 = vld [vmem:[#allocation9 + $0x1e0] sm:$0xf]
    %v1304 = vld [vmem:[#allocation9 + $0x1e4] sm:$0xf]
    %v1305 = vld [vmem:[#allocation9 + $0x1e8] sm:$0xf]
    %v1306 = vld [vmem:[#allocation9 + $0x1ec] sm:$0xf]
    %v1307 = vld [vmem:[#allocation9 + $0x1f0] sm:$0xf]
    %v1308 = vld [vmem:[#allocation9 + $0x1f4] sm:$0xf]
    %v1309 = vld [vmem:[#allocation9 + $0x1f8] sm:$0xf]
    %v1310 = vld [vmem:[#allocation9 + $0x1fc] sm:$0xf]
    %v1311 = vld [vmem:[#allocation9 + $0x200] sm:$0xf]
    %v1312 = vld [vmem:[#allocation9 + $0x204] sm:$0xf]
    %v1313 = vld [vmem:[#allocation9 + $0x208] sm:$0xf]
    %v1314 = vld [vmem:[#allocation9 + $0x20c] sm:$0xf]
    %v1315 = vld [vmem:[#allocation9 + $0x210] sm:$0xf]
    %v1316 = vld [vmem:[#allocation9 + $0x214] sm:$0xf]
    %v1317 = vld [vmem:[#allocation9 + $0x218] sm:$0xf]
    %v1318 = vld [vmem:[#allocation9 + $0x21c] sm:$0xf]
    %v1319 = vld [vmem:[#allocation9 + $0x220] sm:$0xf]
    %v1320 = vld [vmem:[#allocation9 + $0x224] sm:$0xf]
    %v1321 = vld [vmem:[#allocation9 + $0x228] sm:$0xf]
    %v1322 = vld [vmem:[#allocation9 + $0x22c] sm:$0xf]
    %v1323 = vld [vmem:[#allocation9 + $0x230] sm:$0xf]
    %v1324 = vld [vmem:[#allocation9 + $0x234] sm:$0xf]
    %v1325 = vld [vmem:[#allocation9 + $0x238] sm:$0xf]
    %v1326 = vld [vmem:[#allocation9 + $0x23c] sm:$0xf]
    %v1327 = vld [vmem:[#allocation9 + $0x240] sm:$0xf]
    %v1328 = vld [vmem:[#allocation9 + $0x244] sm:$0xf]
    %v1329 = vld [vmem:[#allocation9 + $0x248] sm:$0xf]
    %v1330 = vld [vmem:[#allocation9 + $0x24c] sm:$0xf]
    %v1331 = vld [vmem:[#allocation9 + $0x250] sm:$0xf]
    %v1332 = vld [vmem:[#allocation9 + $0x254] sm:$0xf]
    %v1333 = vld [vmem:[#allocation9 + $0x258] sm:$0xf]
    %v1334 = vld [vmem:[#allocation9 + $0x25c] sm:$0xf]
    %v1335 = vld [vmem:[#allocation9 + $0x260] sm:$0xf]
    %v1336 = vld [vmem:[#allocation9 + $0x264] sm:$0xf]
    %v1337 = vld [vmem:[#allocation9 + $0x268] sm:$0xf]
    %v1338 = vld [vmem:[#allocation9 + $0x26c] sm:$0xf]
    %v1339 = vld [vmem:[#allocation9 + $0x270] sm:$0xf]
    %v1340 = vld [vmem:[#allocation9 + $0x274] sm:$0xf]
    %v1341 = vld [vmem:[#allocation9 + $0x278] sm:$0xf]
    %v1342 = vld [vmem:[#allocation9 + $0x27c] sm:$0xf]
    %v1343 = vld [vmem:[#allocation9 + $0x280] sm:$0xf]
    %v1344 = vld [vmem:[#allocation9 + $0x284] sm:$0xf]
    %v1345 = vld [vmem:[#allocation9 + $0x288] sm:$0xf]
    %v1346 = vld [vmem:[#allocation9 + $0x28c] sm:$0xf]
    %v1347 = vld [vmem:[#allocation9 + $0x290] sm:$0xf]
    %v1348 = vld [vmem:[#allocation9 + $0x294] sm:$0xf]
    %v1349 = vld [vmem:[#allocation9 + $0x298] sm:$0xf]
    %v1350 = vld [vmem:[#allocation9 + $0x29c] sm:$0xf]
    %v1351 = vld [vmem:[#allocation9 + $0x2a0] sm:$0xf]
    %v1352 = vld [vmem:[#allocation9 + $0x2a4] sm:$0xf]
    %v1353 = vld [vmem:[#allocation9 + $0x2a8] sm:$0xf]
    %v1354 = vld [vmem:[#allocation9 + $0x2ac] sm:$0xf]
    %v1355 = vld [vmem:[#allocation9 + $0x2b0] sm:$0xf]
    %v1356 = vld [vmem:[#allocation9 + $0x2b4] sm:$0xf]
    %v1357 = vld [vmem:[#allocation9 + $0x2b8] sm:$0xf]
    %v1358 = vld [vmem:[#allocation9 + $0x2bc] sm:$0xf]
    %v1359 = vld [vmem:[#allocation9 + $0x2c0] sm:$0xf]
    %v1360 = vld [vmem:[#allocation9 + $0x2c4] sm:$0xf]
    %v1361 = vld [vmem:[#allocation9 + $0x2c8] sm:$0xf]
    %v1362 = vld [vmem:[#allocation9 + $0x2cc] sm:$0xf]
    %v1363 = vld [vmem:[#allocation9 + $0x2d0] sm:$0xf]
    %v1364 = vld [vmem:[#allocation9 + $0x2d4] sm:$0xf]
    %v1365 = vld [vmem:[#allocation9 + $0x2d8] sm:$0xf]
    %v1366 = vld [vmem:[#allocation9 + $0x2dc] sm:$0xf]
    %v1367 = vld [vmem:[#allocation9 + $0x2e0] sm:$0xf]
    %v1368 = vld [vmem:[#allocation9 + $0x2e4] sm:$0xf]
    %v1369 = vld [vmem:[#allocation9 + $0x2e8] sm:$0xf]
    %v1370 = vld [vmem:[#allocation9 + $0x2ec] sm:$0xf]
    %v1371 = vld [vmem:[#allocation9 + $0x2f0] sm:$0xf]
    %v1372 = vld [vmem:[#allocation9 + $0x2f4] sm:$0xf]
    %v1373 = vld [vmem:[#allocation9 + $0x2f8] sm:$0xf]
    %v1374 = vld [vmem:[#allocation9 + $0x2fc] sm:$0xf]
    %v1375 = vld [vmem:[#allocation9 + $0x300] sm:$0xf]
    %v1376 = vld [vmem:[#allocation9 + $0x304] sm:$0xf]
    %v1377 = vld [vmem:[#allocation9 + $0x308] sm:$0xf]
    %v1378 = vld [vmem:[#allocation9 + $0x30c] sm:$0xf]
    %v1379 = vld [vmem:[#allocation9 + $0x310] sm:$0xf]
    %v1380 = vld [vmem:[#allocation9 + $0x314] sm:$0xf]
    %v1381 = vld [vmem:[#allocation9 + $0x318] sm:$0xf]
    %v1382 = vld [vmem:[#allocation9 + $0x31c] sm:$0xf]
    %v1383 = vld [vmem:[#allocation9 + $0x320] sm:$0xf]
    %v1384 = vld [vmem:[#allocation9 + $0x324] sm:$0xf]
    %v1385 = vld [vmem:[#allocation9 + $0x328] sm:$0xf]
    %v1386 = vld [vmem:[#allocation9 + $0x32c] sm:$0xf]
    %v1387 = vld [vmem:[#allocation9 + $0x330] sm:$0xf]
    %v1388 = vld [vmem:[#allocation9 + $0x334] sm:$0xf]
    %v1389 = vld [vmem:[#allocation9 + $0x338] sm:$0xf]
    %v1390 = vld [vmem:[#allocation9 + $0x33c] sm:$0xf]
    %v1391 = vld [vmem:[#allocation9 + $0x340] sm:$0xf]
    %v1392 = vld [vmem:[#allocation9 + $0x344] sm:$0xf]
    %v1393 = vld [vmem:[#allocation9 + $0x348] sm:$0xf]
    %v1394 = vld [vmem:[#allocation9 + $0x34c] sm:$0xf]
    %v1395 = vld [vmem:[#allocation9 + $0x350] sm:$0xf]
    %v1396 = vld [vmem:[#allocation9 + $0x354] sm:$0xf]
    %v1397 = vld [vmem:[#allocation9 + $0x358] sm:$0xf]
    %v1398 = vld [vmem:[#allocation9 + $0x35c] sm:$0xf]
    %v1399 = vld [vmem:[#allocation9 + $0x360] sm:$0xf]
    %v1400 = vld [vmem:[#allocation9 + $0x364] sm:$0xf]
    %v1401 = vld [vmem:[#allocation9 + $0x368] sm:$0xf]
    %v1402 = vld [vmem:[#allocation9 + $0x36c] sm:$0xf]
    %v1403 = vld [vmem:[#allocation9 + $0x370] sm:$0xf]
    %v1404 = vld [vmem:[#allocation9 + $0x374] sm:$0xf]
    %v1405 = vld [vmem:[#allocation9 + $0x378] sm:$0xf]
    %v1406 = vld [vmem:[#allocation9 + $0x37c] sm:$0xf]
    %v1407 = vld [vmem:[#allocation9 + $0x380] sm:$0xf]
    %v1408 = vld [vmem:[#allocation9 + $0x384] sm:$0xf]
    %v1409 = vld [vmem:[#allocation9 + $0x388] sm:$0xf]
    %v1410 = vld [vmem:[#allocation9 + $0x38c] sm:$0xf]
    %v1411 = vld [vmem:[#allocation9 + $0x390] sm:$0xf]
    %v1412 = vld [vmem:[#allocation9 + $0x394] sm:$0xf]
    %v1413 = vld [vmem:[#allocation9 + $0x398] sm:$0xf]
    %v1414 = vld [vmem:[#allocation9 + $0x39c] sm:$0xf]
    %v1415 = vld [vmem:[#allocation9 + $0x3a0] sm:$0xf]
    %v1416 = vld [vmem:[#allocation9 + $0x3a4] sm:$0xf]
    %v1417 = vld [vmem:[#allocation9 + $0x3a8] sm:$0xf]
    %v1418 = vld [vmem:[#allocation9 + $0x3ac] sm:$0xf]
    %v1419 = vld [vmem:[#allocation9 + $0x3b0] sm:$0xf]
    %v1420 = vld [vmem:[#allocation9 + $0x3b4] sm:$0xf]
    %v1421 = vld [vmem:[#allocation9 + $0x3b8] sm:$0xf]
    %v1422 = vld [vmem:[#allocation9 + $0x3bc] sm:$0xf]
    %v1423 = vld [vmem:[#allocation9 + $0x3c0] sm:$0xf]
    %v1424 = vld [vmem:[#allocation9 + $0x3c4] sm:$0xf]
    %v1425 = vld [vmem:[#allocation9 + $0x3c8] sm:$0xf]
    %v1426 = vld [vmem:[#allocation9 + $0x3cc] sm:$0xf]
    %v1427 = vld [vmem:[#allocation9 + $0x3d0] sm:$0xf]
    %v1428 = vld [vmem:[#allocation9 + $0x3d4] sm:$0xf]
    %v1429 = vld [vmem:[#allocation9 + $0x3d8] sm:$0xf]
    %v1430 = vld [vmem:[#allocation9 + $0x3dc] sm:$0xf]
    %v1431 = vld [vmem:[#allocation9 + $0x3e0] sm:$0xf]
    %v1432 = vld [vmem:[#allocation9 + $0x3e4] sm:$0xf]
    %v1433 = vld [vmem:[#allocation9 + $0x3e8] sm:$0xf]
    %v1434 = vld [vmem:[#allocation9 + $0x3ec] sm:$0xf]
    %v1435 = vld [vmem:[#allocation9 + $0x3f0] sm:$0xf]
    %v1436 = vld [vmem:[#allocation9 + $0x3f4] sm:$0xf]
    %v1437 = vld [vmem:[#allocation9 + $0x3f8] sm:$0xf]
    %v1438 = vld [vmem:[#allocation9 + $0x3fc] sm:$0xf]
    %v1439 = vld [vmem:[%s5] sm:$0x1]
    %v1441 = vperm.slane %v1439, 0
    %v1699 = vunpack.c.l.b16 %v1183
    %v1700 = vunpack.c.l.b16 %v1184
    %v1701 = vunpack.c.l.b16 %v1185
    %v1702 = vunpack.c.l.b16 %v1186
    %v1703 = vunpack.c.l.b16 %v1187
    %v1704 = vunpack.c.l.b16 %v1188
    %v1705 = vunpack.c.l.b16 %v1189
    %v1706 = vunpack.c.l.b16 %v1190
    %v1707 = vunpack.c.l.b16 %v1191
    %v1708 = vunpack.c.l.b16 %v1192
    %v1709 = vunpack.c.l.b16 %v1193
    %v1710 = vunpack.c.l.b16 %v1194
    %v1711 = vunpack.c.l.b16 %v1195
    %v1712 = vunpack.c.l.b16 %v1196
    %v1713 = vunpack.c.l.b16 %v1197
    %v1714 = vunpack.c.l.b16 %v1198
    %v1715 = vunpack.c.l.b16 %v1199
    %v1716 = vunpack.c.l.b16 %v1200
    %v1717 = vunpack.c.l.b16 %v1201
    %v1718 = vunpack.c.l.b16 %v1202
    %v1719 = vunpack.c.l.b16 %v1203
    %v1720 = vunpack.c.l.b16 %v1204
    %v1721 = vunpack.c.l.b16 %v1205
    %v1722 = vunpack.c.l.b16 %v1206
    %v1723 = vunpack.c.l.b16 %v1207
    %v1724 = vunpack.c.l.b16 %v1208
    %v1725 = vunpack.c.l.b16 %v1209
    %v1726 = vunpack.c.l.b16 %v1210
    %v1727 = vunpack.c.l.b16 %v1211
    %v1728 = vunpack.c.l.b16 %v1212
    %v1729 = vunpack.c.l.b16 %v1213
    %v1730 = vunpack.c.l.b16 %v1214
    %v1731 = vunpack.c.l.b16 %v1215
    %v1732 = vunpack.c.l.b16 %v1216
    %v1733 = vunpack.c.l.b16 %v1217
    %v1734 = vunpack.c.l.b16 %v1218
    %v1735 = vunpack.c.l.b16 %v1219
    %v1736 = vunpack.c.l.b16 %v1220
    %v1737 = vunpack.c.l.b16 %v1221
    %v1738 = vunpack.c.l.b16 %v1222
    %v1739 = vunpack.c.l.b16 %v1223
    %v1740 = vunpack.c.l.b16 %v1224
    %v1741 = vunpack.c.l.b16 %v1225
    %v1742 = vunpack.c.l.b16 %v1226
    %v1743 = vunpack.c.l.b16 %v1227
    %v1744 = vunpack.c.l.b16 %v1228
    %v1745 = vunpack.c.l.b16 %v1229
    %v1746 = vunpack.c.l.b16 %v1230
    %v1747 = vunpack.c.l.b16 %v1231
    %v1748 = vunpack.c.l.b16 %v1232
    %v1749 = vunpack.c.l.b16 %v1233
    %v1750 = vunpack.c.l.b16 %v1234
    %v1751 = vunpack.c.l.b16 %v1235
    %v1752 = vunpack.c.l.b16 %v1236
    %v1753 = vunpack.c.l.b16 %v1237
    %v1754 = vunpack.c.l.b16 %v1238
    %v1755 = vunpack.c.l.b16 %v1239
    %v1756 = vunpack.c.l.b16 %v1240
    %v1757 = vunpack.c.l.b16 %v1241
    %v1758 = vunpack.c.l.b16 %v1242
    %v1759 = vunpack.c.l.b16 %v1243
    %v1760 = vunpack.c.l.b16 %v1244
    %v1761 = vunpack.c.l.b16 %v1245
    %v1762 = vunpack.c.l.b16 %v1246
    %v1763 = vunpack.c.l.b16 %v1247
    %v1764 = vunpack.c.l.b16 %v1248
    %v1765 = vunpack.c.l.b16 %v1249
    %v1766 = vunpack.c.l.b16 %v1250
    %v1767 = vunpack.c.l.b16 %v1251
    %v1768 = vunpack.c.l.b16 %v1252
    %v1769 = vunpack.c.l.b16 %v1253
    %v1770 = vunpack.c.l.b16 %v1254
    %v1771 = vunpack.c.l.b16 %v1255
    %v1772 = vunpack.c.l.b16 %v1256
    %v1773 = vunpack.c.l.b16 %v1257
    %v1774 = vunpack.c.l.b16 %v1258
    %v1775 = vunpack.c.l.b16 %v1259
    %v1776 = vunpack.c.l.b16 %v1260
    %v1777 = vunpack.c.l.b16 %v1261
    %v1778 = vunpack.c.l.b16 %v1262
    %v1779 = vunpack.c.l.b16 %v1263
    %v1780 = vunpack.c.l.b16 %v1264
    %v1781 = vunpack.c.l.b16 %v1265
    %v1782 = vunpack.c.l.b16 %v1266
    %v1783 = vunpack.c.l.b16 %v1267
    %v1784 = vunpack.c.l.b16 %v1268
    %v1785 = vunpack.c.l.b16 %v1269
    %v1786 = vunpack.c.l.b16 %v1270
    %v1787 = vunpack.c.l.b16 %v1271
    %v1788 = vunpack.c.l.b16 %v1272
    %v1789 = vunpack.c.l.b16 %v1273
    %v1790 = vunpack.c.l.b16 %v1274
    %v1791 = vunpack.c.l.b16 %v1275
    %v1792 = vunpack.c.l.b16 %v1276
    %v1793 = vunpack.c.l.b16 %v1277
    %v1794 = vunpack.c.l.b16 %v1278
    %v1795 = vunpack.c.l.b16 %v1279
    %v1796 = vunpack.c.l.b16 %v1280
    %v1797 = vunpack.c.l.b16 %v1281
    %v1798 = vunpack.c.l.b16 %v1282
    %v1799 = vunpack.c.l.b16 %v1283
    %v1800 = vunpack.c.l.b16 %v1284
    %v1801 = vunpack.c.l.b16 %v1285
    %v1802 = vunpack.c.l.b16 %v1286
    %v1803 = vunpack.c.l.b16 %v1287
    %v1804 = vunpack.c.l.b16 %v1288
    %v1805 = vunpack.c.l.b16 %v1289
    %v1806 = vunpack.c.l.b16 %v1290
    %v1807 = vunpack.c.l.b16 %v1291
    %v1808 = vunpack.c.l.b16 %v1292
    %v1809 = vunpack.c.l.b16 %v1293
    %v1810 = vunpack.c.l.b16 %v1294
    %v1811 = vunpack.c.l.b16 %v1295
    %v1812 = vunpack.c.l.b16 %v1296
    %v1813 = vunpack.c.l.b16 %v1297
    %v1814 = vunpack.c.l.b16 %v1298
    %v1815 = vunpack.c.l.b16 %v1299
    %v1816 = vunpack.c.l.b16 %v1300
    %v1817 = vunpack.c.l.b16 %v1301
    %v1818 = vunpack.c.l.b16 %v1302
    %v1819 = vunpack.c.l.b16 %v1303
    %v1820 = vunpack.c.l.b16 %v1304
    %v1821 = vunpack.c.l.b16 %v1305
    %v1822 = vunpack.c.l.b16 %v1306
    %v1823 = vunpack.c.l.b16 %v1307
    %v1824 = vunpack.c.l.b16 %v1308
    %v1825 = vunpack.c.l.b16 %v1309
    %v1826 = vunpack.c.l.b16 %v1310
    %v1827 = vunpack.c.l.b16 %v1311
    %v1828 = vunpack.c.l.b16 %v1312
    %v1829 = vunpack.c.l.b16 %v1313
    %v1830 = vunpack.c.l.b16 %v1314
    %v1831 = vunpack.c.l.b16 %v1315
    %v1832 = vunpack.c.l.b16 %v1316
    %v1833 = vunpack.c.l.b16 %v1317
    %v1834 = vunpack.c.l.b16 %v1318
    %v1835 = vunpack.c.l.b16 %v1319
    %v1836 = vunpack.c.l.b16 %v1320
    %v1837 = vunpack.c.l.b16 %v1321
    %v1838 = vunpack.c.l.b16 %v1322
    %v1839 = vunpack.c.l.b16 %v1323
    %v1840 = vunpack.c.l.b16 %v1324
    %v1841 = vunpack.c.l.b16 %v1325
    %v1842 = vunpack.c.l.b16 %v1326
    %v1843 = vunpack.c.l.b16 %v1327
    %v1844 = vunpack.c.l.b16 %v1328
    %v1845 = vunpack.c.l.b16 %v1329
    %v1846 = vunpack.c.l.b16 %v1330
    %v1847 = vunpack.c.l.b16 %v1331
    %v1848 = vunpack.c.l.b16 %v1332
    %v1849 = vunpack.c.l.b16 %v1333
    %v1850 = vunpack.c.l.b16 %v1334
    %v1851 = vunpack.c.l.b16 %v1335
    %v1852 = vunpack.c.l.b16 %v1336
    %v1853 = vunpack.c.l.b16 %v1337
    %v1854 = vunpack.c.l.b16 %v1338
    %v1855 = vunpack.c.l.b16 %v1339
    %v1856 = vunpack.c.l.b16 %v1340
    %v1857 = vunpack.c.l.b16 %v1341
    %v1858 = vunpack.c.l.b16 %v1342
    %v1859 = vunpack.c.l.b16 %v1343
    %v1860 = vunpack.c.l.b16 %v1344
    %v1861 = vunpack.c.l.b16 %v1345
    %v1862 = vunpack.c.l.b16 %v1346
    %v1863 = vunpack.c.l.b16 %v1347
    %v1864 = vunpack.c.l.b16 %v1348
    %v1865 = vunpack.c.l.b16 %v1349
    %v1866 = vunpack.c.l.b16 %v1350
    %v1867 = vunpack.c.l.b16 %v1351
    %v1868 = vunpack.c.l.b16 %v1352
    %v1869 = vunpack.c.l.b16 %v1353
    %v1870 = vunpack.c.l.b16 %v1354
    %v1871 = vunpack.c.l.b16 %v1355
    %v1872 = vunpack.c.l.b16 %v1356
    %v1873 = vunpack.c.l.b16 %v1357
    %v1874 = vunpack.c.l.b16 %v1358
    %v1875 = vunpack.c.l.b16 %v1359
    %v1876 = vunpack.c.l.b16 %v1360
    %v1877 = vunpack.c.l.b16 %v1361
    %v1878 = vunpack.c.l.b16 %v1362
    %v1879 = vunpack.c.l.b16 %v1363
    %v1880 = vunpack.c.l.b16 %v1364
    %v1881 = vunpack.c.l.b16 %v1365
    %v1882 = vunpack.c.l.b16 %v1366
    %v1883 = vunpack.c.l.b16 %v1367
    %v1884 = vunpack.c.l.b16 %v1368
    %v1885 = vunpack.c.l.b16 %v1369
    %v1886 = vunpack.c.l.b16 %v1370
    %v1887 = vunpack.c.l.b16 %v1371
    %v1888 = vunpack.c.l.b16 %v1372
    %v1889 = vunpack.c.l.b16 %v1373
    %v1890 = vunpack.c.l.b16 %v1374
    %v1891 = vunpack.c.l.b16 %v1375
    %v1892 = vunpack.c.l.b16 %v1376
    %v1893 = vunpack.c.l.b16 %v1377
    %v1894 = vunpack.c.l.b16 %v1378
    %v1895 = vunpack.c.l.b16 %v1379
    %v1896 = vunpack.c.l.b16 %v1380
    %v1897 = vunpack.c.l.b16 %v1381
    %v1898 = vunpack.c.l.b16 %v1382
    %v1899 = vunpack.c.l.b16 %v1383
    %v1900 = vunpack.c.l.b16 %v1384
    %v1901 = vunpack.c.l.b16 %v1385
    %v1902 = vunpack.c.l.b16 %v1386
    %v1903 = vunpack.c.l.b16 %v1387
    %v1904 = vunpack.c.l.b16 %v1388
    %v1905 = vunpack.c.l.b16 %v1389
    %v1906 = vunpack.c.l.b16 %v1390
    %v1907 = vunpack.c.l.b16 %v1391
    %v1908 = vunpack.c.l.b16 %v1392
    %v1909 = vunpack.c.l.b16 %v1393
    %v1910 = vunpack.c.l.b16 %v1394
    %v1911 = vunpack.c.l.b16 %v1395
    %v1912 = vunpack.c.l.b16 %v1396
    %v1913 = vunpack.c.l.b16 %v1397
    %v1914 = vunpack.c.l.b16 %v1398
    %v1915 = vunpack.c.l.b16 %v1399
    %v1916 = vunpack.c.l.b16 %v1400
    %v1917 = vunpack.c.l.b16 %v1401
    %v1918 = vunpack.c.l.b16 %v1402
    %v1919 = vunpack.c.l.b16 %v1403
    %v1920 = vunpack.c.l.b16 %v1404
    %v1921 = vunpack.c.l.b16 %v1405
    %v1922 = vunpack.c.l.b16 %v1406
    %v1923 = vunpack.c.l.b16 %v1407
    %v1924 = vunpack.c.l.b16 %v1408
    %v1925 = vunpack.c.l.b16 %v1409
    %v1926 = vunpack.c.l.b16 %v1410
    %v1927 = vunpack.c.l.b16 %v1411
    %v1928 = vunpack.c.l.b16 %v1412
    %v1929 = vunpack.c.l.b16 %v1413
    %v1930 = vunpack.c.l.b16 %v1414
    %v1931 = vunpack.c.l.b16 %v1415
    %v1932 = vunpack.c.l.b16 %v1416
    %v1933 = vunpack.c.l.b16 %v1417
    %v1934 = vunpack.c.l.b16 %v1418
    %v1935 = vunpack.c.l.b16 %v1419
    %v1936 = vunpack.c.l.b16 %v1420
    %v1937 = vunpack.c.l.b16 %v1421
    %v1938 = vunpack.c.l.b16 %v1422
    %v1939 = vunpack.c.l.b16 %v1423
    %v1940 = vunpack.c.l.b16 %v1424
    %v1941 = vunpack.c.l.b16 %v1425
    %v1942 = vunpack.c.l.b16 %v1426
    %v1943 = vunpack.c.l.b16 %v1427
    %v1944 = vunpack.c.l.b16 %v1428
    %v1945 = vunpack.c.l.b16 %v1429
    %v1946 = vunpack.c.l.b16 %v1430
    %v1947 = vunpack.c.l.b16 %v1431
    %v1948 = vunpack.c.l.b16 %v1432
    %v1949 = vunpack.c.l.b16 %v1433
    %v1950 = vunpack.c.l.b16 %v1434
    %v1951 = vunpack.c.l.b16 %v1435
    %v1952 = vunpack.c.l.b16 %v1436
    %v1953 = vunpack.c.l.b16 %v1437
    %v1954 = vunpack.c.l.b16 %v1438
    %v1955 = vpack.c.b16 %v1700, %v1699
    %v1956 = vpack.c.b16 %v1702, %v1701
    %v1957 = vpack.c.b16 %v1704, %v1703
    %v1958 = vpack.c.b16 %v1706, %v1705
    %v1959 = vpack.c.b16 %v1708, %v1707
    %v1960 = vpack.c.b16 %v1710, %v1709
    %v1961 = vpack.c.b16 %v1712, %v1711
    %v1962 = vpack.c.b16 %v1714, %v1713
    %v1963 = vpack.c.b16 %v1716, %v1715
    %v1964 = vpack.c.b16 %v1718, %v1717
    %v1965 = vpack.c.b16 %v1720, %v1719
    %v1966 = vpack.c.b16 %v1722, %v1721
    %v1967 = vpack.c.b16 %v1724, %v1723
    %v1968 = vpack.c.b16 %v1726, %v1725
    %v1969 = vpack.c.b16 %v1728, %v1727
    %v1970 = vpack.c.b16 %v1730, %v1729
    %v1971 = vpack.c.b16 %v1732, %v1731
    %v1972 = vpack.c.b16 %v1734, %v1733
    %v1973 = vpack.c.b16 %v1736, %v1735
    %v1974 = vpack.c.b16 %v1738, %v1737
    %v1975 = vpack.c.b16 %v1740, %v1739
    %v1976 = vpack.c.b16 %v1742, %v1741
    %v1977 = vpack.c.b16 %v1744, %v1743
    %v1978 = vpack.c.b16 %v1746, %v1745
    %v1979 = vpack.c.b16 %v1748, %v1747
    %v1980 = vpack.c.b16 %v1750, %v1749
    %v1981 = vpack.c.b16 %v1752, %v1751
    %v1982 = vpack.c.b16 %v1754, %v1753
    %v1983 = vpack.c.b16 %v1756, %v1755
    %v1984 = vpack.c.b16 %v1758, %v1757
    %v1985 = vpack.c.b16 %v1760, %v1759
    %v1986 = vpack.c.b16 %v1762, %v1761
    %v1987 = vpack.c.b16 %v1764, %v1763
    %v1988 = vpack.c.b16 %v1766, %v1765
    %v1989 = vpack.c.b16 %v1768, %v1767
    %v1990 = vpack.c.b16 %v1770, %v1769
    %v1991 = vpack.c.b16 %v1772, %v1771
    %v1992 = vpack.c.b16 %v1774, %v1773
    %v1993 = vpack.c.b16 %v1776, %v1775
    %v1994 = vpack.c.b16 %v1778, %v1777
    %v1995 = vpack.c.b16 %v1780, %v1779
    %v1996 = vpack.c.b16 %v1782, %v1781
    %v1997 = vpack.c.b16 %v1784, %v1783
    %v1998 = vpack.c.b16 %v1786, %v1785
    %v1999 = vpack.c.b16 %v1788, %v1787
    %v2000 = vpack.c.b16 %v1790, %v1789
    %v2001 = vpack.c.b16 %v1792, %v1791
    %v2002 = vpack.c.b16 %v1794, %v1793
    %v2003 = vpack.c.b16 %v1796, %v1795
    %v2004 = vpack.c.b16 %v1798, %v1797
    %v2005 = vpack.c.b16 %v1800, %v1799
    %v2006 = vpack.c.b16 %v1802, %v1801
    %v2007 = vpack.c.b16 %v1804, %v1803
    %v2008 = vpack.c.b16 %v1806, %v1805
    %v2009 = vpack.c.b16 %v1808, %v1807
    %v2010 = vpack.c.b16 %v1810, %v1809
    %v2011 = vpack.c.b16 %v1812, %v1811
    %v2012 = vpack.c.b16 %v1814, %v1813
    %v2013 = vpack.c.b16 %v1816, %v1815
    %v2014 = vpack.c.b16 %v1818, %v1817
    %v2015 = vpack.c.b16 %v1820, %v1819
    %v2016 = vpack.c.b16 %v1822, %v1821
    %v2017 = vpack.c.b16 %v1824, %v1823
    %v2018 = vpack.c.b16 %v1826, %v1825
    %v2019 = vpack.c.b16 %v1828, %v1827
    %v2020 = vpack.c.b16 %v1830, %v1829
    %v2021 = vpack.c.b16 %v1832, %v1831
    %v2022 = vpack.c.b16 %v1834, %v1833
    %v2023 = vpack.c.b16 %v1836, %v1835
    %v2024 = vpack.c.b16 %v1838, %v1837
    %v2025 = vpack.c.b16 %v1840, %v1839
    %v2026 = vpack.c.b16 %v1842, %v1841
    %v2027 = vpack.c.b16 %v1844, %v1843
    %v2028 = vpack.c.b16 %v1846, %v1845
    %v2029 = vpack.c.b16 %v1848, %v1847
    %v2030 = vpack.c.b16 %v1850, %v1849
    %v2031 = vpack.c.b16 %v1852, %v1851
    %v2032 = vpack.c.b16 %v1854, %v1853
    %v2033 = vpack.c.b16 %v1856, %v1855
    %v2034 = vpack.c.b16 %v1858, %v1857
    %v2035 = vpack.c.b16 %v1860, %v1859
    %v2036 = vpack.c.b16 %v1862, %v1861
    %v2037 = vpack.c.b16 %v1864, %v1863
    %v2038 = vpack.c.b16 %v1866, %v1865
    %v2039 = vpack.c.b16 %v1868, %v1867
    %v2040 = vpack.c.b16 %v1870, %v1869
    %v2041 = vpack.c.b16 %v1872, %v1871
    %v2042 = vpack.c.b16 %v1874, %v1873
    %v2043 = vpack.c.b16 %v1876, %v1875
    %v2044 = vpack.c.b16 %v1878, %v1877
    %v2045 = vpack.c.b16 %v1880, %v1879
    %v2046 = vpack.c.b16 %v1882, %v1881
    %v2047 = vpack.c.b16 %v1884, %v1883
    %v2048 = vpack.c.b16 %v1886, %v1885
    %v2049 = vpack.c.b16 %v1888, %v1887
    %v2050 = vpack.c.b16 %v1890, %v1889
    %v2051 = vpack.c.b16 %v1892, %v1891
    %v2052 = vpack.c.b16 %v1894, %v1893
    %v2053 = vpack.c.b16 %v1896, %v1895
    %v2054 = vpack.c.b16 %v1898, %v1897
    %v2055 = vpack.c.b16 %v1900, %v1899
    %v2056 = vpack.c.b16 %v1902, %v1901
    %v2057 = vpack.c.b16 %v1904, %v1903
    %v2058 = vpack.c.b16 %v1906, %v1905
    %v2059 = vpack.c.b16 %v1908, %v1907
    %v2060 = vpack.c.b16 %v1910, %v1909
    %v2061 = vpack.c.b16 %v1912, %v1911
    %v2062 = vpack.c.b16 %v1914, %v1913
    %v2063 = vpack.c.b16 %v1916, %v1915
    %v2064 = vpack.c.b16 %v1918, %v1917
    %v2065 = vpack.c.b16 %v1920, %v1919
    %v2066 = vpack.c.b16 %v1922, %v1921
    %v2067 = vpack.c.b16 %v1924, %v1923
    %v2068 = vpack.c.b16 %v1926, %v1925
    %v2069 = vpack.c.b16 %v1928, %v1927
    %v2070 = vpack.c.b16 %v1930, %v1929
    %v2071 = vpack.c.b16 %v1932, %v1931
    %v2072 = vpack.c.b16 %v1934, %v1933
    %v2073 = vpack.c.b16 %v1936, %v1935
    %v2074 = vpack.c.b16 %v1938, %v1937
    %v2075 = vpack.c.b16 %v1940, %v1939
    %v2076 = vpack.c.b16 %v1942, %v1941
    %v2077 = vpack.c.b16 %v1944, %v1943
    %v2078 = vpack.c.b16 %v1946, %v1945
    %v2079 = vpack.c.b16 %v1948, %v1947
    %v2080 = vpack.c.b16 %v1950, %v1949
    %v2081 = vpack.c.b16 %v1952, %v1951
    %v2082 = vpack.c.b16 %v1954, %v1953
    %2211 = vmatpush.bf16.msra.mxu0 %v1962
    %2212 = vmatpush.bf16.msra.mxu0 %v1961
    %2213 = vmatpush.bf16.msra.mxu0 %v1960
    %2214 = vmatpush.bf16.msra.mxu0 %v1959
    %2215 = vmatpush.bf16.msra.mxu0 %v1958
    %2216 = vmatpush.bf16.msra.mxu0 %v1957
    %2217 = vmatpush.bf16.msra.mxu0 %v1956
    %2218 = vmatpush.bf16.msra.mxu0 %v1955
    %2219 = vmatmul.bf16.gmra.mxu0 %v1167
    %v2220 = vpop.f32.mrf.mxu0
    %v2221 = vadd.f32 %v1441, %v2220
    %v2222 = vpop.f32.mrf.mxu0
    %v2223 = vadd.f32 %v1441, %v2222
    %2224 = vdwg.mxu0
    %2225 = vmatpush.bf16.msra.mxu0 %v1970
    %2226 = vmatpush.bf16.msra.mxu0 %v1969
    %2227 = vmatpush.bf16.msra.mxu0 %v1968
    %2228 = vmatpush.bf16.msra.mxu0 %v1967
    %2229 = vmatpush.bf16.msra.mxu0 %v1966
    %2230 = vmatpush.bf16.msra.mxu0 %v1965
    %2231 = vmatpush.bf16.msra.mxu0 %v1964
    %2232 = vmatpush.bf16.msra.mxu0 %v1963
    %2233 = vmatmul.bf16.gmra.mxu0 %v1168
    %v2234 = vpop.f32.mrf.mxu0
    %v2235 = vadd.f32 %v2221, %v2234
    %v2236 = vpop.f32.mrf.mxu0
    %v2237 = vadd.f32 %v2223, %v2236
    %2238 = vdwg.mxu0
    %2239 = vmatpush.bf16.msra.mxu0 %v1978
    %2240 = vmatpush.bf16.msra.mxu0 %v1977
    %2241 = vmatpush.bf16.msra.mxu0 %v1976
    %2242 = vmatpush.bf16.msra.mxu0 %v1975
    %2243 = vmatpush.bf16.msra.mxu0 %v1974
    %2244 = vmatpush.bf16.msra.mxu0 %v1973
    %2245 = vmatpush.bf16.msra.mxu0 %v1972
    %2246 = vmatpush.bf16.msra.mxu0 %v1971
    %2247 = vmatmul.bf16.gmra.mxu0 %v1169
    %v2248 = vpop.f32.mrf.mxu0
    %v2249 = vadd.f32 %v2235, %v2248
    %v2250 = vpop.f32.mrf.mxu0
    %v2251 = vadd.f32 %v2237, %v2250
    %2252 = vdwg.mxu0
    %2253 = vmatpush.bf16.msra.mxu0 %v1986
    %2254 = vmatpush.bf16.msra.mxu0 %v1985
    %2255 = vmatpush.bf16.msra.mxu0 %v1984
    %2256 = vmatpush.bf16.msra.mxu0 %v1983
    %2257 = vmatpush.bf16.msra.mxu0 %v1982
    %2258 = vmatpush.bf16.msra.mxu0 %v1981
    %2259 = vmatpush.bf16.msra.mxu0 %v1980
    %2260 = vmatpush.bf16.msra.mxu0 %v1979
    %2261 = vmatmul.bf16.gmra.mxu0 %v1170
    %v2262 = vpop.f32.mrf.mxu0
    %v2263 = vadd.f32 %v2249, %v2262
    %v2264 = vpop.f32.mrf.mxu0
    %v2265 = vadd.f32 %v2251, %v2264
    %2266 = vdwg.mxu0
    %2267 = vmatpush.bf16.msra.mxu0 %v1994
    %2268 = vmatpush.bf16.msra.mxu0 %v1993
    %2269 = vmatpush.bf16.msra.mxu0 %v1992
    %2270 = vmatpush.bf16.msra.mxu0 %v1991
    %2271 = vmatpush.bf16.msra.mxu0 %v1990
    %2272 = vmatpush.bf16.msra.mxu0 %v1989
    %2273 = vmatpush.bf16.msra.mxu0 %v1988
    %2274 = vmatpush.bf16.msra.mxu0 %v1987
    %2275 = vmatmul.bf16.gmra.mxu0 %v1171
    %v2276 = vpop.f32.mrf.mxu0
    %v2277 = vadd.f32 %v2263, %v2276
    %v2278 = vpop.f32.mrf.mxu0
    %v2279 = vadd.f32 %v2265, %v2278
    %2280 = vdwg.mxu0
    %2281 = vmatpush.bf16.msra.mxu0 %v2002
    %2282 = vmatpush.bf16.msra.mxu0 %v2001
    %2283 = vmatpush.bf16.msra.mxu0 %v2000
    %2284 = vmatpush.bf16.msra.mxu0 %v1999
    %2285 = vmatpush.bf16.msra.mxu0 %v1998
    %2286 = vmatpush.bf16.msra.mxu0 %v1997
    %2287 = vmatpush.bf16.msra.mxu0 %v1996
    %2288 = vmatpush.bf16.msra.mxu0 %v1995
    %2289 = vmatmul.bf16.gmra.mxu0 %v1172
    %v2290 = vpop.f32.mrf.mxu0
    %v2291 = vadd.f32 %v2277, %v2290
    %v2292 = vpop.f32.mrf.mxu0
    %v2293 = vadd.f32 %v2279, %v2292
    %2294 = vdwg.mxu0
    %2295 = vmatpush.bf16.msra.mxu0 %v2010
    %2296 = vmatpush.bf16.msra.mxu0 %v2009
    %2297 = vmatpush.bf16.msra.mxu0 %v2008
    %2298 = vmatpush.bf16.msra.mxu0 %v2007
    %2299 = vmatpush.bf16.msra.mxu0 %v2006
    %2300 = vmatpush.bf16.msra.mxu0 %v2005
    %2301 = vmatpush.bf16.msra.mxu0 %v2004
    %2302 = vmatpush.bf16.msra.mxu0 %v2003
    %2303 = vmatmul.bf16.gmra.mxu0 %v1173
    %v2304 = vpop.f32.mrf.mxu0
    %v2305 = vadd.f32 %v2291, %v2304
    %v2306 = vpop.f32.mrf.mxu0
    %v2307 = vadd.f32 %v2293, %v2306
    %2308 = vdwg.mxu0
    %2309 = vmatpush.bf16.msra.mxu0 %v2018
    %2310 = vmatpush.bf16.msra.mxu0 %v2017
    %2311 = vmatpush.bf16.msra.mxu0 %v2016
    %2312 = vmatpush.bf16.msra.mxu0 %v2015
    %2313 = vmatpush.bf16.msra.mxu0 %v2014
    %2314 = vmatpush.bf16.msra.mxu0 %v2013
    %2315 = vmatpush.bf16.msra.mxu0 %v2012
    %2316 = vmatpush.bf16.msra.mxu0 %v2011
    %2317 = vmatmul.bf16.gmra.mxu0 %v1174
    %v2318 = vpop.f32.mrf.mxu0
    %v2319 = vadd.f32 %v2305, %v2318
    %v2320 = vpop.f32.mrf.mxu0
    %v2321 = vadd.f32 %v2307, %v2320
    %2322 = vdwg.mxu0
    %2323 = vmatpush.bf16.msra.mxu0 %v2026
    %2324 = vmatpush.bf16.msra.mxu0 %v2025
    %2325 = vmatpush.bf16.msra.mxu0 %v2024
    %2326 = vmatpush.bf16.msra.mxu0 %v2023
    %2327 = vmatpush.bf16.msra.mxu0 %v2022
    %2328 = vmatpush.bf16.msra.mxu0 %v2021
    %2329 = vmatpush.bf16.msra.mxu0 %v2020
    %2330 = vmatpush.bf16.msra.mxu0 %v2019
    %2331 = vmatmul.bf16.gmra.mxu0 %v1175
    %v2332 = vpop.f32.mrf.mxu0
    %v2333 = vadd.f32 %v2319, %v2332
    %v2334 = vpop.f32.mrf.mxu0
    %v2335 = vadd.f32 %v2321, %v2334
    %2336 = vdwg.mxu0
    %2337 = vmatpush.bf16.msra.mxu0 %v2034
    %2338 = vmatpush.bf16.msra.mxu0 %v2033
    %2339 = vmatpush.bf16.msra.mxu0 %v2032
    %2340 = vmatpush.bf16.msra.mxu0 %v2031
    %2341 = vmatpush.bf16.msra.mxu0 %v2030
    %2342 = vmatpush.bf16.msra.mxu0 %v2029
    %2343 = vmatpush.bf16.msra.mxu0 %v2028
    %2344 = vmatpush.bf16.msra.mxu0 %v2027
    %2345 = vmatmul.bf16.gmra.mxu0 %v1176
    %v2346 = vpop.f32.mrf.mxu0
    %v2347 = vadd.f32 %v2333, %v2346
    %v2348 = vpop.f32.mrf.mxu0
    %v2349 = vadd.f32 %v2335, %v2348
    %2350 = vdwg.mxu0
    %2351 = vmatpush.bf16.msra.mxu0 %v2042
    %2352 = vmatpush.bf16.msra.mxu0 %v2041
    %2353 = vmatpush.bf16.msra.mxu0 %v2040
    %2354 = vmatpush.bf16.msra.mxu0 %v2039
    %2355 = vmatpush.bf16.msra.mxu0 %v2038
    %2356 = vmatpush.bf16.msra.mxu0 %v2037
    %2357 = vmatpush.bf16.msra.mxu0 %v2036
    %2358 = vmatpush.bf16.msra.mxu0 %v2035
    %2359 = vmatmul.bf16.gmra.mxu0 %v1177
    %v2360 = vpop.f32.mrf.mxu0
    %v2361 = vadd.f32 %v2347, %v2360
    %v2362 = vpop.f32.mrf.mxu0
    %v2363 = vadd.f32 %v2349, %v2362
    %2364 = vdwg.mxu0
    %2365 = vmatpush.bf16.msra.mxu0 %v2050
    %2366 = vmatpush.bf16.msra.mxu0 %v2049
    %2367 = vmatpush.bf16.msra.mxu0 %v2048
    %2368 = vmatpush.bf16.msra.mxu0 %v2047
    %2369 = vmatpush.bf16.msra.mxu0 %v2046
    %2370 = vmatpush.bf16.msra.mxu0 %v2045
    %2371 = vmatpush.bf16.msra.mxu0 %v2044
    %2372 = vmatpush.bf16.msra.mxu0 %v2043
    %2373 = vmatmul.bf16.gmra.mxu0 %v1178
    %v2374 = vpop.f32.mrf.mxu0
    %v2375 = vadd.f32 %v2361, %v2374
    %v2376 = vpop.f32.mrf.mxu0
    %v2377 = vadd.f32 %v2363, %v2376
    %2378 = vdwg.mxu0
    %2379 = vmatpush.bf16.msra.mxu0 %v2058
    %2380 = vmatpush.bf16.msra.mxu0 %v2057
    %2381 = vmatpush.bf16.msra.mxu0 %v2056
    %2382 = vmatpush.bf16.msra.mxu0 %v2055
    %2383 = vmatpush.bf16.msra.mxu0 %v2054
    %2384 = vmatpush.bf16.msra.mxu0 %v2053
    %2385 = vmatpush.bf16.msra.mxu0 %v2052
    %2386 = vmatpush.bf16.msra.mxu0 %v2051
    %2387 = vmatmul.bf16.gmra.mxu0 %v1179
    %v2388 = vpop.f32.mrf.mxu0
    %v2389 = vadd.f32 %v2375, %v2388
    %v2390 = vpop.f32.mrf.mxu0
    %v2391 = vadd.f32 %v2377, %v2390
    %2392 = vdwg.mxu0
    %2393 = vmatpush.bf16.msra.mxu0 %v2066
    %2394 = vmatpush.bf16.msra.mxu0 %v2065
    %2395 = vmatpush.bf16.msra.mxu0 %v2064
    %2396 = vmatpush.bf16.msra.mxu0 %v2063
    %2397 = vmatpush.bf16.msra.mxu0 %v2062
    %2398 = vmatpush.bf16.msra.mxu0 %v2061
    %2399 = vmatpush.bf16.msra.mxu0 %v2060
    %2400 = vmatpush.bf16.msra.mxu0 %v2059
    %2401 = vmatmul.bf16.gmra.mxu0 %v1180
    %v2402 = vpop.f32.mrf.mxu0
    %v2403 = vadd.f32 %v2389, %v2402
    %v2404 = vpop.f32.mrf.mxu0
    %v2405 = vadd.f32 %v2391, %v2404
    %2406 = vdwg.mxu0
    %2407 = vmatpush.bf16.msra.mxu0 %v2074
    %2408 = vmatpush.bf16.msra.mxu0 %v2073
    %2409 = vmatpush.bf16.msra.mxu0 %v2072
    %2410 = vmatpush.bf16.msra.mxu0 %v2071
    %2411 = vmatpush.bf16.msra.mxu0 %v2070
    %2412 = vmatpush.bf16.msra.mxu0 %v2069
    %2413 = vmatpush.bf16.msra.mxu0 %v2068
    %2414 = vmatpush.bf16.msra.mxu0 %v2067
    %2415 = vmatmul.bf16.gmra.mxu0 %v1181
    %v2416 = vpop.f32.mrf.mxu0
    %v2417 = vadd.f32 %v2403, %v2416
    %v2418 = vpop.f32.mrf.mxu0
    %v2419 = vadd.f32 %v2405, %v2418
    %2420 = vdwg.mxu0
    %2421 = vmatpush.bf16.msra.mxu0 %v2082
    %2422 = vmatpush.bf16.msra.mxu0 %v2081
    %2423 = vmatpush.bf16.msra.mxu0 %v2080
    %2424 = vmatpush.bf16.msra.mxu0 %v2079
    %2425 = vmatpush.bf16.msra.mxu0 %v2078
    %2426 = vmatpush.bf16.msra.mxu0 %v2077
    %2427 = vmatpush.bf16.msra.mxu0 %v2076
    %2428 = vmatpush.bf16.msra.mxu0 %v2075
    %2429 = vmatmul.bf16.gmra.mxu0 %v1182
    %v2430 = vpop.f32.mrf.mxu0
    %v2431 = vadd.f32 %v2417, %v2430
    %v2432 = vpop.f32.mrf.mxu0
    %v2433 = vadd.f32 %v2419, %v2432
    %2434 = vdwg.mxu0
    %v2435 = vld [vmem:[#allocation4] sm:$0xf]
    %v2436 = vld [vmem:[#allocation4 + $0x4] sm:$0xf]
    %v2437 = vunpack.c.l.bf16 %v2435
    %v2438 = vunpack.c.l.bf16 %v2436
    %v2439 = vmul.f32 %v2431, %v2437
    %v2440 = vmul.f32 %v2433, %v2438
    %2441 = vadd.xlane.f32.xlu0 %v2439
    %v2442 = vpop.xlane.xlu0 %2441
    %2443 = vadd.xlane.f32.xlu0 %v2440
    %v2444 = vpop.xlane.xlu0 %2443
    %vm2445 = vcmask 7168
    %2446 = vst.msk [vmem:[%s6] sm:$0xff] %vm2445, %v2442
    %2447 = vst.msk [vmem:[%s6 + $0x8] sm:$0xff] %vm2445, %v2444
    // Predicated region
    $region46: #{tpu_custom_call.1} parent=1 // pred_check
      _
    $region47: #{tpu_custom_call.1} parent=1 // pred_check_branch
      %2449 = sbr.rel (0) target = $region49
    $region48: #{tpu_custom_call.1} parent=1 // pred_region
      _
    $region49: #{tpu_custom_call.1} parent=1 // pred_fallthru
      _
    // Predicated region
    $region50: #{tpu_custom_call.1} parent=1 // pred_check
      _
    $region51: #{tpu_custom_call.1} parent=1 // pred_check_branch
      %2451 = sbr.rel (0) target = $region53
    $region52: #{tpu_custom_call.1} parent=1 // pred_region
      _
    $region53: #{tpu_custom_call.1} parent=1 // pred_fallthru
      _
    %2452 = vsyncpa [#allocation3], 1
    %2453 = vsyncpa [#allocation5], 1
    %2454 = vsyncpa [#allocation8], 1

</llo_original>
